<compile_context>
chip_gen: v6e
topology: v6e:2x2x1
jax: 0.10.0
libtpu: 0.0.40
codegen_flags: <defaults>
</compile_context>

<pallas_src>
import functools

import jax
import jax.numpy as jnp
from jax import lax
from jax.experimental import pallas as pl
from jax.experimental.pallas import tpu as pltpu


def autopad(k, p=None):
    # mirrors the PyTorch helper used by CBL
    if p is None:
        p = k // 2
    return p


def _cbl_kernel(x_ref, w_ref, b_ref, o_ref, *, K, Wp, R, neg_slope):
    """Fused KxK conv (stride 1) + folded-BN bias + LeakyReLU on one row strip.

    x_ref: (1, 1, C1, L)       bf16; channels on sublanes, flattened padded
                               (h, w) row-major on lanes (strip incl. halo).
    w_ref: (K*K, C2, C1)       bf16 conv weights with the BN scale folded in,
                               taps ordered (dy, dx) on the leading axis.
    b_ref: (C2, 1)             f32 folded BN bias.
    o_ref: (1, C2, R) / (1, 1, C2, R)  output tile, R = TH*Wp flattened (h, w);
                               columns w >= W are junk, sliced off by wrapper.
    """
    # Per-tap accumulating matmuls: every conv tap (dy, dx) is a contiguous
    # lane-offset slice of the flattened strip; each (C2,C1)x(C1,R) bf16 matmul
    # accumulates in f32 vregs.  No im2col concat, no f32<->bf16 round trips.
    y = None
    for dy in range(K):
        for dx in range(K):
            off = dy * Wp + dx
            tap = jnp.dot(w_ref[dy * K + dx],                 # (C2, C1) bf16
                          x_ref[0, 0, :, off:off + R],        # (C1, R)  bf16
                          preferred_element_type=jnp.float32)
            y = tap if y is None else y + tap                 # (C2, R) f32
    y = y + b_ref[...]                                        # folded BN bias
    y = jnp.where(y >= 0, y, neg_slope * y)                   # LeakyReLU (f32)
    o_ref[...] = y.reshape(o_ref.shape).astype(o_ref.dtype)


def _strip_bytes(th, Wp, K, C1, C2, out_bytes):
    """Approx. VMEM footprint of one grid step (double-buffered blocks + temps)."""
    R = th * Wp
    L = (th + K - 1) * Wp + (K - 1)
    return (2 * C1 * L * 2            # input block (bf16, double-buffered)
            + 2 * K * K * C2 * C1 * 2  # weight block
            + 2 * C2 * 4               # bias block
            + 2 * C2 * R * out_bytes   # output block
            + 3 * C2 * R * 4           # f32 accumulator + per-tap temporary
            + 2 * C1 * R * 2)          # sliced rhs operands


def _pick_tile_h(H, Wp, K, C1, C2, out_bytes, budget):
    th = 1
    for cand in range(1, H + 1):
        if _strip_bytes(cand, Wp, K, C1, C2, out_bytes) <= budget:
            th = cand
    # keep stores reasonably lane-dense (R >= 128) if a slightly bigger strip fits
    while (th < H and th * Wp < 128
           and _strip_bytes(th + 1, Wp, K, C1, C2, out_bytes) <= 2 * budget):
        th += 1
    return th


def cbl_forward(x_nchw, weight_oihw, gamma, beta, running_mean, running_var,
                eps=1e-5, negative_slope=0.01, stride=1, padding=None,
                tile_h=None):
    """CBL forward: LeakyReLU(BN(Conv2d(x))). Input/output are NCHW."""
    assert stride == 1, "only the CBL default stride=1 is implemented"
    C2, C1, K, K2 = weight_oihw.shape
    assert K == K2 and K % 2 == 1, "odd square kernels only"
    p = autopad(K, padding)
    assert p == K // 2, "only 'same' autopad is supported"
    N, _, H, W = x_nchw.shape
    Hp, Wp = H + 2 * p, W + 2 * p
    out_dtype = x_nchw.dtype
    out_bytes = jnp.dtype(out_dtype).itemsize
    KK = K * K

    # ---- per-generation VMEM budget: half of physical capacity leaves room
    # for compiler scratch; v7x (64 MiB/TC) is automatically halved vs
    # v5e/v6e (128 MiB).
    try:
        vmem_cap = int(pltpu.get_tpu_info().vmem_capacity_bytes)
    except Exception:
        vmem_cap = 64 * 1024 * 1024     # conservative (v7x per-TensorCore)
    budget = vmem_cap // 2

    if tile_h is None:
        TH = _pick_tile_h(H, Wp, K, C1, C2, out_bytes, budget)
    else:
        TH = max(1, min(int(tile_h), H))
    nT = pl.cdiv(H, TH)
    R = TH * Wp                          # output positions computed per strip
    L = (TH + K - 1) * Wp + (K - 1)      # strip length incl. halo + wrap slack
    # TODO(synk): when N == 1 and nT == 1 on v7x, splitting into 2 strips would
    # let both TensorCores work; not forced here to keep the no-copy fast path.

    # ---- input glue: keep channels-major (no NCHW->NHWC transpose), pad
    # spatially (plus slack bottom rows so all strip/halo reads are in bounds),
    # flatten (h, w) onto the lane axis, cast to bf16 so DMA moves half bytes.
    padded_len = (nT - 1) * TH * Wp + L
    extra_rows = -(-(padded_len - Hp * Wp) // Wp)           # ceil, >= 0
    x_pad = jnp.pad(x_nchw.astype(jnp.bfloat16),
                    ((0, 0), (0, 0), (p, p + extra_rows), (p, p)))
    full_len = (Hp + extra_rows) * Wp
    x_flat = x_pad.reshape(N, C1, full_len)

    if nT == 1:
        # whole image per grid step: kernel DMAs straight from the padded
        # input -- no wrapper-side strip copy at all.
        x_in = x_flat[:, None, :, :]                        # (N, 1, C1, full_len)
        Lx = full_len
        x_spec = pl.BlockSpec((1, 1, C1, Lx), lambda n, t: (n, 0, 0, 0))
    else:
        # tiled fallback: static overlapping slices (no XLA gather/transpose).
        # TODO(synk): an element-offset (halo) BlockSpec would remove this copy.
        strips = [lax.slice_in_dim(x_flat, t * TH * Wp, t * TH * Wp + L, axis=2)
                  for t in range(nT)]
        x_in = jnp.stack(strips, axis=1)                     # (N, nT, C1, L)
        Lx = L
        x_spec = pl.BlockSpec((1, 1, C1, Lx), lambda n, t: (n, t, 0, 0))

    # ---- weights: OIHW -> (K*K, C2, C1) taps, BN scale folded in (conv is
    # linear, so numerically identical).
    inv_std = lax.rsqrt(running_var.astype(jnp.float32) + eps)
    scale = gamma.astype(jnp.float32) * inv_std                        # (C2,)
    bias = beta.astype(jnp.float32) - running_mean.astype(jnp.float32) * scale
    w = weight_oihw.astype(jnp.float32) * scale[:, None, None, None]   # (C2,C1,K,K)
    w_taps = jnp.transpose(w, (2, 3, 0, 1)).reshape(KK, C2, C1).astype(jnp.bfloat16)
    bias2d = bias.reshape(C2, 1)

    # TODO(synk): w_taps/bias2d are grid-invariant; pipeline_mode=pl.Buffered(1)
    # would save one VMEM buffer each (minor).
    w_spec = pl.BlockSpec((KK, C2, C1), lambda n, t: (0, 0, 0))
    b_spec = pl.BlockSpec((C2, 1), lambda n, t: (0, 0))

    if nT == 1:
        out_shape = jax.ShapeDtypeStruct((N, C2, R), out_dtype)
        out_spec = pl.BlockSpec((1, C2, R), lambda n, t: (n, 0, 0))
    else:
        out_shape = jax.ShapeDtypeStruct((N, nT, C2, R), out_dtype)
        out_spec = pl.BlockSpec((1, 1, C2, R), lambda n, t: (n, t, 0, 0))

    kernel = functools.partial(_cbl_kernel, K=K, Wp=Wp, R=R,
                               neg_slope=float(negative_slope))

    flops = 2 * N * nT * KK * C1 * C2 * R
    bytes_accessed = (x_in.size * 2 + w_taps.size * 2 + bias2d.size * 4
                      + N * nT * C2 * R * out_bytes)
    need = _strip_bytes(TH, Wp, K, C1, C2, out_bytes)
    vmem_limit = int(min(vmem_cap * 3 // 4, max(8 * 1024 * 1024, 2 * need)))

    out = pl.pallas_call(
        kernel,
        out_shape=out_shape,
        grid_spec=pltpu.PrefetchScalarGridSpec(
            num_scalar_prefetch=0,
            grid=(N, nT),
            in_specs=[x_spec, w_spec, b_spec],
            out_specs=out_spec,
        ),
        compiler_params=pltpu.CompilerParams(
            dimension_semantics=("parallel", "parallel"),
            vmem_limit_bytes=vmem_limit),
        cost_estimate=pl.CostEstimate(flops=int(flops), transcendentals=0,
                                      bytes_accessed=int(bytes_accessed)),
    )(x_in, w_taps, bias2d)

    # ---- output glue: drop junk columns/rows; no transpose on the main path.
    if nT == 1:
        out = out.reshape(N, C2, TH, Wp)
    else:
        # TODO(synk): this transpose is one extra HBM round trip of the output;
        # a (N, C2, nT*R) layout would remove it once R is a multiple of 128.
        out = out.reshape(N, nT, C2, TH, Wp)
        out = jnp.transpose(out, (0, 2, 1, 3, 4)).reshape(N, C2, nT * TH, Wp)
    return out[:, :, :H, :W]


if __name__ == "__main__":
    # small shapes consistent with CBL(c1=8, c2=16, k=3, s=1)
    N, C1, C2, H, W, K = 2, 8, 16, 16, 16, 3
    eps, neg_slope = 1e-5, 0.01

    key = jax.random.PRNGKey(0)
    kx, kw, kg, kb, km, kv = jax.random.split(key, 6)

    x = jax.random.normal(kx, (N, C1, H, W), jnp.float32)               # NCHW
    weight = 0.1 * jax.random.normal(kw, (C2, C1, K, K), jnp.float32)   # OIHW, bias=False
    gamma = 1.0 + 0.1 * jax.random.normal(kg, (C2,), jnp.float32)       # bn.weight
    beta = 0.1 * jax.random.normal(kb, (C2,), jnp.float32)              # bn.bias
    running_mean = 0.1 * jax.random.normal(km, (C2,), jnp.float32)
    running_var = jax.random.uniform(kv, (C2,), jnp.float32, minval=0.5, maxval=1.5)

    # no tile_h override: let the VMEM-aware picker choose (whole image here).
    out = cbl_forward(x, weight, gamma, beta, running_mean, running_var,
                      eps=eps, negative_slope=neg_slope)
    out = jax.block_until_ready(out)

    # pure-JAX reference (XLA conv, f32); bf16 MXU operands in the Pallas
    # kernel justify the ~1e-2-level tolerance.
    p = K // 2
    ref = lax.conv_general_dilated(
        x, weight, window_strides=(1, 1), padding=((p, p), (p, p)),
        dimension_numbers=("NCHW", "OIHW", "NCHW"))
    inv = gamma / jnp.sqrt(running_var + eps)
    ref = ref * inv[None, :, None, None] + (beta - running_mean * inv)[None, :, None, None]
    ref = jnp.where(ref > 0, ref, neg_slope * ref)

    assert out.shape == (N, C2, H, W)
    assert jnp.allclose(out, ref, rtol=2e-2, atol=2e-2), "mismatch vs reference"
    print("KERNEL_OK")
</pallas_src>

<mosaic_0001>
module attributes {stable_mosaic.version = 11 : i64} {
  func.func @_cbl_kernel(%arg0: i32, %arg1: i32, %arg2: memref<1x1x8x342xbf16, #tpu.memory_space<vmem>>, %arg3: memref<9x16x8xbf16, #tpu.memory_space<vmem>>, %arg4: memref<16x1xf32, #tpu.memory_space<vmem>>, %arg5: memref<1x16x288xf32, #tpu.memory_space<vmem>>) attributes {dimension_semantics = [#tpu.dimension_semantics<parallel>, #tpu.dimension_semantics<parallel>], iteration_bounds = array<i64: 2, 1>, scalar_prefetch = 0 : i64, scratch_operands = 0 : i64, tpu.core_type = #tpu.core_type<tc>, window_params = [{transform_indices = @transform_0, window_bounds = array<i64: 1, 1, 8, 342>}, {pipeline_mode = #tpu.pipeline_mode<synchronous>, transform_indices = @transform_1, window_bounds = array<i64: 9, 16, 8>}, {pipeline_mode = #tpu.pipeline_mode<synchronous>, transform_indices = @transform_2, window_bounds = array<i64: 16, 1>}, {transform_indices = @transform_3, window_bounds = array<i64: 1, 16, 288>}]} {
    %c0 = arith.constant 0 : index
    %c0_0 = arith.constant 0 : index
    %c0_1 = arith.constant 0 : index
    %0 = vector.load %arg3[%c0, %c0_0, %c0_1] : memref<9x16x8xbf16, #tpu.memory_space<vmem>>, vector<1x16x8xbf16>
    %1 = vector.shape_cast %0 : vector<1x16x8xbf16> to vector<16x8xbf16>
    %c0_2 = arith.constant 0 : index
    %c0_3 = arith.constant 0 : index
    %c0_4 = arith.constant 0 : index
    %c0_5 = arith.constant 0 : index
    %2 = vector.load %arg2[%c0_2, %c0_3, %c0_4, %c0_5] : memref<1x1x8x342xbf16, #tpu.memory_space<vmem>>, vector<1x1x8x288xbf16>
    %3 = vector.shape_cast %2 : vector<1x1x8x288xbf16> to vector<8x288xbf16>
    %cst = arith.constant dense<0.000000e+00> : vector<16x288xf32>
    %4 = tpu.matmul %1, %3, %cst {dimension_numbers = #tpu.dot_dimension_numbers<[1], [0], [0], [1], [0, 0, 1, 1], [], []>} : vector<16x8xbf16>, vector<8x288xbf16>, vector<16x288xf32> -> vector<16x288xf32>
    %c1 = arith.constant 1 : index
    %c0_6 = arith.constant 0 : index
    %c0_7 = arith.constant 0 : index
    %5 = vector.load %arg3[%c1, %c0_6, %c0_7] : memref<9x16x8xbf16, #tpu.memory_space<vmem>>, vector<1x16x8xbf16>
    %6 = vector.shape_cast %5 : vector<1x16x8xbf16> to vector<16x8xbf16>
    %c0_8 = arith.constant 0 : index
    %c0_9 = arith.constant 0 : index
    %c0_10 = arith.constant 0 : index
    %c1_11 = arith.constant 1 : index
    %7 = vector.load %arg2[%c0_8, %c0_9, %c0_10, %c1_11] : memref<1x1x8x342xbf16, #tpu.memory_space<vmem>>, vector<1x1x8x288xbf16>
    %8 = vector.shape_cast %7 : vector<1x1x8x288xbf16> to vector<8x288xbf16>
    %cst_12 = arith.constant dense<0.000000e+00> : vector<16x288xf32>
    %9 = tpu.matmul %6, %8, %cst_12 {dimension_numbers = #tpu.dot_dimension_numbers<[1], [0], [0], [1], [0, 0, 1, 1], [], []>} : vector<16x8xbf16>, vector<8x288xbf16>, vector<16x288xf32> -> vector<16x288xf32>
    %10 = arith.addf %4, %9 : vector<16x288xf32>
    %c2 = arith.constant 2 : index
    %c0_13 = arith.constant 0 : index
    %c0_14 = arith.constant 0 : index
    %11 = vector.load %arg3[%c2, %c0_13, %c0_14] : memref<9x16x8xbf16, #tpu.memory_space<vmem>>, vector<1x16x8xbf16>
    %12 = vector.shape_cast %11 : vector<1x16x8xbf16> to vector<16x8xbf16>
    %c0_15 = arith.constant 0 : index
    %c0_16 = arith.constant 0 : index
    %c0_17 = arith.constant 0 : index
    %c2_18 = arith.constant 2 : index
    %13 = vector.load %arg2[%c0_15, %c0_16, %c0_17, %c2_18] : memref<1x1x8x342xbf16, #tpu.memory_space<vmem>>, vector<1x1x8x288xbf16>
    %14 = vector.shape_cast %13 : vector<1x1x8x288xbf16> to vector<8x288xbf16>
    %cst_19 = arith.constant dense<0.000000e+00> : vector<16x288xf32>
    %15 = tpu.matmul %12, %14, %cst_19 {dimension_numbers = #tpu.dot_dimension_numbers<[1], [0], [0], [1], [0, 0, 1, 1], [], []>} : vector<16x8xbf16>, vector<8x288xbf16>, vector<16x288xf32> -> vector<16x288xf32>
    %16 = arith.addf %10, %15 : vector<16x288xf32>
    %c3 = arith.constant 3 : index
    %c0_20 = arith.constant 0 : index
    %c0_21 = arith.constant 0 : index
    %17 = vector.load %arg3[%c3, %c0_20, %c0_21] : memref<9x16x8xbf16, #tpu.memory_space<vmem>>, vector<1x16x8xbf16>
    %18 = vector.shape_cast %17 : vector<1x16x8xbf16> to vector<16x8xbf16>
    %c0_22 = arith.constant 0 : index
    %c0_23 = arith.constant 0 : index
    %c0_24 = arith.constant 0 : index
    %c18 = arith.constant 18 : index
    %19 = vector.load %arg2[%c0_22, %c0_23, %c0_24, %c18] : memref<1x1x8x342xbf16, #tpu.memory_space<vmem>>, vector<1x1x8x288xbf16>
    %20 = vector.shape_cast %19 : vector<1x1x8x288xbf16> to vector<8x288xbf16>
    %cst_25 = arith.constant dense<0.000000e+00> : vector<16x288xf32>
    %21 = tpu.matmul %18, %20, %cst_25 {dimension_numbers = #tpu.dot_dimension_numbers<[1], [0], [0], [1], [0, 0, 1, 1], [], []>} : vector<16x8xbf16>, vector<8x288xbf16>, vector<16x288xf32> -> vector<16x288xf32>
    %22 = arith.addf %16, %21 : vector<16x288xf32>
    %c4 = arith.constant 4 : index
    %c0_26 = arith.constant 0 : index
    %c0_27 = arith.constant 0 : index
    %23 = vector.load %arg3[%c4, %c0_26, %c0_27] : memref<9x16x8xbf16, #tpu.memory_space<vmem>>, vector<1x16x8xbf16>
    %24 = vector.shape_cast %23 : vector<1x16x8xbf16> to vector<16x8xbf16>
    %c0_28 = arith.constant 0 : index
    %c0_29 = arith.constant 0 : index
    %c0_30 = arith.constant 0 : index
    %c19 = arith.constant 19 : index
    %25 = vector.load %arg2[%c0_28, %c0_29, %c0_30, %c19] : memref<1x1x8x342xbf16, #tpu.memory_space<vmem>>, vector<1x1x8x288xbf16>
    %26 = vector.shape_cast %25 : vector<1x1x8x288xbf16> to vector<8x288xbf16>
    %cst_31 = arith.constant dense<0.000000e+00> : vector<16x288xf32>
    %27 = tpu.matmul %24, %26, %cst_31 {dimension_numbers = #tpu.dot_dimension_numbers<[1], [0], [0], [1], [0, 0, 1, 1], [], []>} : vector<16x8xbf16>, vector<8x288xbf16>, vector<16x288xf32> -> vector<16x288xf32>
    %28 = arith.addf %22, %27 : vector<16x288xf32>
    %c5 = arith.constant 5 : index
    %c0_32 = arith.constant 0 : index
    %c0_33 = arith.constant 0 : index
    %29 = vector.load %arg3[%c5, %c0_32, %c0_33] : memref<9x16x8xbf16, #tpu.memory_space<vmem>>, vector<1x16x8xbf16>
    %30 = vector.shape_cast %29 : vector<1x16x8xbf16> to vector<16x8xbf16>
    %c0_34 = arith.constant 0 : index
    %c0_35 = arith.constant 0 : index
    %c0_36 = arith.constant 0 : index
    %c20 = arith.constant 20 : index
    %31 = vector.load %arg2[%c0_34, %c0_35, %c0_36, %c20] : memref<1x1x8x342xbf16, #tpu.memory_space<vmem>>, vector<1x1x8x288xbf16>
    %32 = vector.shape_cast %31 : vector<1x1x8x288xbf16> to vector<8x288xbf16>
    %cst_37 = arith.constant dense<0.000000e+00> : vector<16x288xf32>
    %33 = tpu.matmul %30, %32, %cst_37 {dimension_numbers = #tpu.dot_dimension_numbers<[1], [0], [0], [1], [0, 0, 1, 1], [], []>} : vector<16x8xbf16>, vector<8x288xbf16>, vector<16x288xf32> -> vector<16x288xf32>
    %34 = arith.addf %28, %33 : vector<16x288xf32>
    %c6 = arith.constant 6 : index
    %c0_38 = arith.constant 0 : index
    %c0_39 = arith.constant 0 : index
    %35 = vector.load %arg3[%c6, %c0_38, %c0_39] : memref<9x16x8xbf16, #tpu.memory_space<vmem>>, vector<1x16x8xbf16>
    %36 = vector.shape_cast %35 : vector<1x16x8xbf16> to vector<16x8xbf16>
    %c0_40 = arith.constant 0 : index
    %c0_41 = arith.constant 0 : index
    %c0_42 = arith.constant 0 : index
    %c36 = arith.constant 36 : index
    %37 = vector.load %arg2[%c0_40, %c0_41, %c0_42, %c36] : memref<1x1x8x342xbf16, #tpu.memory_space<vmem>>, vector<1x1x8x288xbf16>
    %38 = vector.shape_cast %37 : vector<1x1x8x288xbf16> to vector<8x288xbf16>
    %cst_43 = arith.constant dense<0.000000e+00> : vector<16x288xf32>
    %39 = tpu.matmul %36, %38, %cst_43 {dimension_numbers = #tpu.dot_dimension_numbers<[1], [0], [0], [1], [0, 0, 1, 1], [], []>} : vector<16x8xbf16>, vector<8x288xbf16>, vector<16x288xf32> -> vector<16x288xf32>
    %40 = arith.addf %34, %39 : vector<16x288xf32>
    %c7 = arith.constant 7 : index
    %c0_44 = arith.constant 0 : index
    %c0_45 = arith.constant 0 : index
    %41 = vector.load %arg3[%c7, %c0_44, %c0_45] : memref<9x16x8xbf16, #tpu.memory_space<vmem>>, vector<1x16x8xbf16>
    %42 = vector.shape_cast %41 : vector<1x16x8xbf16> to vector<16x8xbf16>
    %c0_46 = arith.constant 0 : index
    %c0_47 = arith.constant 0 : index
    %c0_48 = arith.constant 0 : index
    %c37 = arith.constant 37 : index
    %43 = vector.load %arg2[%c0_46, %c0_47, %c0_48, %c37] : memref<1x1x8x342xbf16, #tpu.memory_space<vmem>>, vector<1x1x8x288xbf16>
    %44 = vector.shape_cast %43 : vector<1x1x8x288xbf16> to vector<8x288xbf16>
    %cst_49 = arith.constant dense<0.000000e+00> : vector<16x288xf32>
    %45 = tpu.matmul %42, %44, %cst_49 {dimension_numbers = #tpu.dot_dimension_numbers<[1], [0], [0], [1], [0, 0, 1, 1], [], []>} : vector<16x8xbf16>, vector<8x288xbf16>, vector<16x288xf32> -> vector<16x288xf32>
    %46 = arith.addf %40, %45 : vector<16x288xf32>
    %c8 = arith.constant 8 : index
    %c0_50 = arith.constant 0 : index
    %c0_51 = arith.constant 0 : index
    %47 = vector.load %arg3[%c8, %c0_50, %c0_51] : memref<9x16x8xbf16, #tpu.memory_space<vmem>>, vector<1x16x8xbf16>
    %48 = vector.shape_cast %47 : vector<1x16x8xbf16> to vector<16x8xbf16>
    %c0_52 = arith.constant 0 : index
    %c0_53 = arith.constant 0 : index
    %c0_54 = arith.constant 0 : index
    %c38 = arith.constant 38 : index
    %49 = vector.load %arg2[%c0_52, %c0_53, %c0_54, %c38] : memref<1x1x8x342xbf16, #tpu.memory_space<vmem>>, vector<1x1x8x288xbf16>
    %50 = vector.shape_cast %49 : vector<1x1x8x288xbf16> to vector<8x288xbf16>
    %cst_55 = arith.constant dense<0.000000e+00> : vector<16x288xf32>
    %51 = tpu.matmul %48, %50, %cst_55 {dimension_numbers = #tpu.dot_dimension_numbers<[1], [0], [0], [1], [0, 0, 1, 1], [], []>} : vector<16x8xbf16>, vector<8x288xbf16>, vector<16x288xf32> -> vector<16x288xf32>
    %52 = arith.addf %46, %51 : vector<16x288xf32>
    %c0_56 = arith.constant 0 : index
    %c0_57 = arith.constant 0 : index
    %53 = vector.load %arg4[%c0_56, %c0_57] : memref<16x1xf32, #tpu.memory_space<vmem>>, vector<16x1xf32>
    %54 = vector.broadcast %53 : vector<16x1xf32> to vector<16x288xf32>
    %55 = arith.addf %52, %54 : vector<16x288xf32>
    %cst_58 = arith.constant 0.000000e+00 : f32
    %56 = vector.broadcast %cst_58 : f32 to vector<16x288xf32>
    %57 = arith.cmpf oge, %55, %56 : vector<16x288xf32>
    %cst_59 = arith.constant 0.00999999977 : f32
    %58 = vector.broadcast %cst_59 : f32 to vector<16x288xf32>
    %59 = arith.mulf %58, %55 : vector<16x288xf32>
    %60 = arith.select %57, %55, %59 : vector<16x288xi1>, vector<16x288xf32>
    %61 = vector.shape_cast %60 : vector<16x288xf32> to vector<1x16x288xf32>
    %c0_60 = arith.constant 0 : index
    %c0_61 = arith.constant 0 : index
    %c0_62 = arith.constant 0 : index
    %62 = vector.load %arg5[%c0_60, %c0_61, %c0_62] : memref<1x16x288xf32, #tpu.memory_space<vmem>>, vector<1x16x288xf32>
    tpu.vector_store %arg5[%c0_60, %c0_61, %c0_62], %61 {strides = array<i32>} : memref<1x16x288xf32, #tpu.memory_space<vmem>>, vector<1x16x288xf32>,
    return
  }
  func.func @transform_0(%arg0: i32, %arg1: i32) -> (i32, i32, i32, i32) {
    %c0_i32 = arith.constant 0 : i32
    %c0_i32_0 = arith.constant 0 : i32
    %c0_i32_1 = arith.constant 0 : i32
    %c0_i32_2 = arith.constant 0 : i32
    return %arg0, %c0_i32, %c0_i32_0, %c0_i32_1 : i32, i32, i32, i32
  }
  func.func @transform_1(%arg0: i32, %arg1: i32) -> (i32, i32, i32) {
    %c0_i32 = arith.constant 0 : i32
    %c0_i32_0 = arith.constant 0 : i32
    %c0_i32_1 = arith.constant 0 : i32
    %c0_i32_2 = arith.constant 0 : i32
    return %c0_i32, %c0_i32_0, %c0_i32_1 : i32, i32, i32
  }
  func.func @transform_2(%arg0: i32, %arg1: i32) -> (i32, i32) {
    %c0_i32 = arith.constant 0 : i32
    %c0_i32_0 = arith.constant 0 : i32
    %c0_i32_1 = arith.constant 0 : i32
    return %c0_i32, %c0_i32_0 : i32, i32
  }
  func.func @transform_3(%arg0: i32, %arg1: i32) -> (i32, i32, i32) {
    %c0_i32 = arith.constant 0 : i32
    %c0_i32_0 = arith.constant 0 : i32
    %c0_i32_1 = arith.constant 0 : i32
    return %arg0, %c0_i32, %c0_i32_0 : i32, i32, i32
  }
}

</mosaic_0001>

<llo_original>
// kernel: tpu_custom_call.1
$region0: #{tpu_custom_call.1}
  #allocation0 [shape = 'u32[]', space=smem, size = 0x4, offset = 0x4, fixed_abs, tag = 'smem constant byte address 0x4 - core index']
  #allocation1 [shape = 'u32[144,128]{1,0:T(1,128)}', space=vmem, size = 0x12000, scoped, tag = 'internal scratch']
  %s0 = inlined_call_operand.vmem [shape: bf16[2,1,8,342], index: 0, kind: input, shape index: {}]
  %s1 = inlined_call_operand.vmem [shape: bf16[9,16,8], index: 1, kind: input, shape index: {}]
  %s2 = inlined_call_operand.vmem [shape: f32[16,1], index: 2, kind: input, shape index: {}]
  %s3 = inlined_call_operand.hbm [shape: f32[2,16,288], index: 3, kind: output, shape index: {}]
  %s4 = sld [smem:[#allocation0]]
  $region45: #{tpu_custom_call.1} parent=0
    _
  %s6 = ssub.s32 1, %s4
  %s7 = scalar_select 0, %s6, %s4
  $region1: #{tpu_custom_call.1} parent=0
    #allocation2 [shape = 'u8[49152]{0}', space=vmem, size = 0xc000, scoped, tag = 'output window, operand 0']
    #allocation3 [shape = 's32[2]{0}', space=sflag, size = 0x8, scoped, tag = 'scoped memory for tpu_custom_call.1']
    %8 = vsyncpa [#allocation3], 0
    %s9 = scalar_lea.sflag [#allocation3], 1
    %10 = vsyncpa %s9, 0
    loop: start=0, step=1, limit=4
    $region2: #{tpu_custom_call.1} parent=1 // loop_pre_header
      _
    $region3: #{tpu_custom_call.1} parent=1 // loop_header
      %s12 = sphi 0, %s16
      %p13 = scmp.ge.s32.totalorder %s12, 4
      %s19 = sphi 0, %s31
      %s20 = sphi 0, %s27
      %s21 = sphi 0, %s19
      %s22 = sphi 0, %s20
      %s23 = sphi 0, %s21
      %s24 = sphi 0, %s22
      %s34 = sphi 0, %s36
      %s37 = sphi 0, %s34
      %s38 = sphi 0, %s37
      %s54 = sphi 0, %s38
      %s58 = sphi 0, %s58
      %s60 = sphi 0, %s58
      %s61 = sphi 0, %s60
      %s75 = sphi 0, %s61
      %s79 = sphi 0, %s79
      %s81 = sphi 0, %s79
      %s82 = sphi 0, %s81
      %s96 = sphi 0, %s82
      %s102 = sphi 0, %s104
      %s105 = sphi 0, %s102
      %s106 = sphi 0, %s105
      %s122 = sphi 0, %s106
    $region4: #{tpu_custom_call.1} parent=1 // loop_header_branch
      %15 = sbr.rel (%p13) target = $region8
    $region5: #{tpu_custom_call.1} parent=1 // loop_body
      %s17 = ssub.s32 %s12, 1
      %s18 = ssub.s32 %s12, 2
      %s25 = sadd.s32 1, %s20
      %p26 = scmp.ge.s32.totalorder %s25, 1
      %s27 = scalar_select %p26, 0, %s25
      %s28 = sadd.s32 1, %s19
      %s29 = scalar_select %p26, %s28, %s19
      %p30 = scmp.ge.s32.totalorder %s29, 2
      %s31 = scalar_select %p30, 0, %s29
      %s32 = ssub.s32 %s19, %s31
      %p33 = scmp.eq.s32.totalorder %s32, 0
      %s35 = sadd.s32 %s34, 1
      %s36 = scalar_select %p33, %s34, %s35
      %p39 = pneg %p33
      %p40 = scmp.eq.s32.totalorder %s12, 1
      %p41 = por %p39, %p40
      %p42 = scmp.ne.s32.totalorder %s34, %s37
      %p43 = scmp.eq.s32.totalorder %s12, 0
      %p44 = por %p42, %p43
      %p45 = scmp.ne.s32.totalorder %s34, %s37
      %p46 = scmp.eq.s32.totalorder %s17, 1
      %p47 = por %p45, %p46
      %p48 = scmp.ne.s32.totalorder %s37, %s38
      %p49 = scmp.eq.s32.totalorder %s17, 0
      %p50 = por %p48, %p49
      %p51 = scmp.ne.s32.totalorder %s37, %s38
      %p52 = scmp.eq.s32.totalorder %s18, 1
      %p53 = por %p51, %p52
      %p55 = scmp.ne.s32.totalorder %s38, %s54
      %p56 = scmp.eq.s32.totalorder %s18, 0
      %p57 = por %p55, %p56
      %s59 = sadd.s32 %s58, 1
      %p62 = scmp.eq.s32.totalorder %s12, 1
      %p63 = scmp.ne.s32.totalorder %s58, %s60
      %p64 = scmp.eq.s32.totalorder %s12, 0
      %p65 = por %p63, %p64
      %p66 = scmp.ne.s32.totalorder %s58, %s60
      %p67 = scmp.eq.s32.totalorder %s17, 1
      %p68 = por %p66, %p67
      %p69 = scmp.ne.s32.totalorder %s60, %s61
      %p70 = scmp.eq.s32.totalorder %s17, 0
      %p71 = por %p69, %p70
      %p72 = scmp.ne.s32.totalorder %s60, %s61
      %p73 = scmp.eq.s32.totalorder %s18, 1
      %p74 = por %p72, %p73
      %p76 = scmp.ne.s32.totalorder %s61, %s75
      %p77 = scmp.eq.s32.totalorder %s18, 0
      %p78 = por %p76, %p77
      %s80 = sadd.s32 %s79, 1
      %p83 = scmp.eq.s32.totalorder %s12, 1
      %p84 = scmp.ne.s32.totalorder %s79, %s81
      %p85 = scmp.eq.s32.totalorder %s12, 0
      %p86 = por %p84, %p85
      %p87 = scmp.ne.s32.totalorder %s79, %s81
      %p88 = scmp.eq.s32.totalorder %s17, 1
      %p89 = por %p87, %p88
      %p90 = scmp.ne.s32.totalorder %s81, %s82
      %p91 = scmp.eq.s32.totalorder %s17, 0
      %p92 = por %p90, %p91
      %p93 = scmp.ne.s32.totalorder %s81, %s82
      %p94 = scmp.eq.s32.totalorder %s18, 1
      %p95 = por %p93, %p94
      %p97 = scmp.ne.s32.totalorder %s82, %s96
      %p98 = scmp.eq.s32.totalorder %s18, 0
      %p99 = por %p97, %p98
      %s100 = ssub.s32 %s19, %s31
      %p101 = scmp.eq.s32.totalorder %s100, 0
      %s103 = sadd.s32 %s102, 1
      %s104 = scalar_select %p101, %s102, %s103
      %p107 = pneg %p101
      %p108 = scmp.eq.s32.totalorder %s12, 1
      %p109 = por %p107, %p108
      %p110 = scmp.ne.s32.totalorder %s102, %s105
      %p111 = scmp.eq.s32.totalorder %s12, 0
      %p112 = por %p110, %p111
      %p113 = scmp.ne.s32.totalorder %s102, %s105
      %p114 = scmp.eq.s32.totalorder %s17, 1
      %p115 = por %p113, %p114
      %p116 = scmp.ne.s32.totalorder %s105, %s106
      %p117 = scmp.eq.s32.totalorder %s17, 0
      %p118 = por %p116, %p117
      %p119 = scmp.ne.s32.totalorder %s105, %s106
      %p120 = scmp.eq.s32.totalorder %s18, 1
      %p121 = por %p119, %p120
      %p123 = scmp.ne.s32.totalorder %s106, %s122
      %p124 = scmp.eq.s32.totalorder %s18, 0
      %p125 = por %p123, %p124
      %p126 = scmp.le.s32.totalorder 1, %s12
      %p127 = scmp.lt.s32.totalorder %s12, 3
      %p128 = pnand %p126, %p127
      %p129 = pneg %p128
      // Predicated region
      $region9: #{tpu_custom_call.1} parent=5 // pred_check
        _
      $region10: #{tpu_custom_call.1} parent=5 // pred_check_branch
        %131 = sbr.rel (%p128) target = $region12
      $region11: #{tpu_custom_call.1} parent=5 // pred_region
        %s132 = ssub.s32 %s12, 1
        // Predicated region
        $region13: #{tpu_custom_call.1} parent=11 // pred_check
          %p133 = pneg %p71
        $region14: #{tpu_custom_call.1} parent=11 // pred_check_branch
          %135 = sbr.rel (%p133) target = $region16
        $region15: #{tpu_custom_call.1} parent=11 // pred_region
          _
        $region16: #{tpu_custom_call.1} parent=11 // pred_fallthru
          _
        // Predicated region
        $region17: #{tpu_custom_call.1} parent=11 // pred_check
          %p136 = pneg %p92
        $region18: #{tpu_custom_call.1} parent=11 // pred_check_branch
          %138 = sbr.rel (%p136) target = $region20
        $region19: #{tpu_custom_call.1} parent=11 // pred_region
          _
        $region20: #{tpu_custom_call.1} parent=11 // pred_fallthru
          _
      $region12: #{tpu_custom_call.1} parent=5 // pred_fallthru
        _
      %p139 = scmp.lt.s32.totalorder %s12, 2
      // Predicated region
      $region21: #{tpu_custom_call.1} parent=5 // pred_check
        %p140 = pneg %p139
      $region22: #{tpu_custom_call.1} parent=5 // pred_check_branch
        %142 = sbr.rel (%p140) target = $region24
      $region23: #{tpu_custom_call.1} parent=5 // pred_region
        // Predicated region
        $region25: #{tpu_custom_call.1} parent=23 // pred_check
          %p143 = pneg %p44
        $region26: #{tpu_custom_call.1} parent=23 // pred_check_branch
          %145 = sbr.rel (%p143) target = $region28
        $region27: #{tpu_custom_call.1} parent=23 // pred_region
          %p146 = scmp.lt.s32.totalorder %s19, 1
          %s147 = scalar_select %p146, %s19, 1
          %s148 = smul.addr %s147, 3
          %s149 = smul.addr %s148, 4
          %s150 = scalar_lea.vmem %s0, %s149
        $region28: #{tpu_custom_call.1} parent=23 // pred_fallthru
          _
      $region24: #{tpu_custom_call.1} parent=5 // pred_fallthru
        _
      %p151 = scmp.le.s32.totalorder 1, %s12
      %p152 = scmp.lt.s32.totalorder %s12, 3
      %p153 = pnand %p151, %p152
      %p154 = pneg %p153
      // Predicated region
      $region29: #{tpu_custom_call.1} parent=5 // pred_check
        _
      $region30: #{tpu_custom_call.1} parent=5 // pred_check_branch
        %156 = sbr.rel (%p153) target = $region32
      $region31: #{tpu_custom_call.1} parent=5 // pred_region
        %s157 = ssub.s32 %s12, 1
        %p158 = scmp.lt.s32.totalorder %s21, 1
        %s159 = scalar_select %p158, %s21, 1
        %s160 = smul.addr %s159, 3
        %s161 = smul.addr %s160, 4
        %s162 = scalar_lea.vmem %s0, %s161
        %p163 = pneg %p50
        %p164 = pneg %p47
        %p165 = pneg %p71
        %p166 = pneg %p68
        %p167 = pneg %p92
        %p168 = pneg %p89
        %p169 = pneg %p118
        %p170 = pneg %p115
        %s171 = sand.u32 %s105, 1
        %s172 = scalar_lea.sflag [#allocation3], %s171
        %s173 = sand.u32 %s105, 1
        %s174 = smul.addr %s173, 48
        %s175 = scalar_lea.vmem [#allocation2], %s174
        %p176 = scmp.lt.s32.totalorder %s21, 1
        %s177 = scalar_select %p176, %s21, 1
        %s178 = smul.addr %s177, 3
        %s179 = smul.addr %s178, 4
        %s180 = scalar_lea.vmem %s0, %s179
        %v182 = vld [vmem:[%s1] sm:$0xf]
        %v183 = vld [vmem:[%s1 + $0x4] sm:$0xf]
        %v184 = vld [vmem:[%s180] sm:$0xff]
        %v185 = vld [vmem:[%s180 + $0x8] sm:$0xf]
        %s186 = scalar_lea.vmem %s1, 8
        %v187 = vld [vmem:[%s186] sm:$0xf]
        %v188 = vld [vmem:[%s186 + $0x4] sm:$0xf]
        %v191 = vunpack.c.l.b16 %v187
        %v192 = vunpack.c.l.b16 %v188
        %v193 = vpack.c.b16 %v192, %v191
        %v196 = vunpack.c.l.b16 %v184
        %v197 = vunpack.c.h.b16 %v184
        %v198 = vunpack.c.l.b16 %v185
        %v199 = vpack.c.b16 %v196, %v196
        %v200 = vpack.c.b16 %v197, %v197
        %v201 = vpack.c.b16 %v198, %v198
        %202 = vrot.lane.b32.xlu0 %v199, 127
        %v203 = vpop.permute.xlu0 %202
        %204 = vrot.lane.b32.xlu0 %v200, 127
        %v205 = vpop.permute.xlu0 %204
        %206 = vrot.lane.b32.xlu0 %v201, 127
        %v207 = vpop.permute.xlu0 %206
        %vm208 = vcmask 1039360
        %v209 = vsel %vm208, %v203, %v205
        %v210 = vsel %vm208, %v205, %v207
        %vm211 = vcmask 64512
        %v213 = vsel %vm211, %v193, 0
        %vm215 = vcmask 1043456
        %v217 = vsel %vm215, %v209, 0
        %v220 = vsel %vm215, %v210, 0
        %v223 = vsel %vm215, %v207, 0
        %225 = vmatprep.subr.bf16.mxu0 0
        %226 = vmatpush1.bf16.msra.mxu0 0
        %227 = vmatprep.subr.bf16.mxu0 0
        %228 = vmatpush1.bf16.msra.mxu0 0
        %229 = vmatprep.subr.bf16.mxu0 0
        %230 = vmatpush1.bf16.msra.mxu0 0
        %231 = vmatprep.subr.bf16.mxu0 0
        %232 = vmatpush1.bf16.msra.mxu0 0
        %233 = vmatprep.subr.bf16.mxu0 0
        %234 = vmatpush1.bf16.msra.mxu0 0
        %235 = vmatprep.subr.bf16.mxu0 0
        %236 = vmatpush1.bf16.msra.mxu0 0
        %237 = vmatprep.subr.bf16.mxu0 0
        %238 = vmatpush1.bf16.msra.mxu0 0
        %239 = vmatprep.subr.bf16.mxu0 %v220
        %240 = vmatpush1.bf16.msra.mxu0 %v217
        %241 = vmatprep.subr.bf16.mxu0 0
        %242 = vmatpush2.bf16.msra.mxu0 0
        %243 = vmatprep.subr.bf16.mxu0 0
        %244 = vmatpush2.bf16.msra.mxu0 0
        %245 = vmatprep.subr.bf16.mxu0 0
        %246 = vmatpush2.bf16.msra.mxu0 0
        %247 = vmatprep.subr.bf16.mxu0 0
        %248 = vmatpush2.bf16.msra.mxu0 0
        %249 = vmatprep.subr.bf16.mxu0 0
        %250 = vmatpush2.bf16.msra.mxu0 0
        %251 = vmatprep.subr.bf16.mxu0 0
        %252 = vmatpush2.bf16.msra.mxu0 0
        %253 = vmatprep.subr.bf16.mxu0 0
        %254 = vmatpush2.bf16.msra.mxu0 0
        %255 = vmatprep.subr.bf16.mxu0 0
        %256 = vmatpush2.bf16.msra.mxu0 0
        %257 = vmatprep.mubr.bf16.mxu0 0
        %258 = vmatmul.mubr.bf16.gmra.mxu0 %v213
        %v259 = vpop.f32.mrf.mxu0
        %v260 = vadd.f32 0.0, %v259
        %v261 = vpop.f32.mrf.mxu0
        %v262 = vadd.f32 0.0, %v261
        %v263 = vpop.f32.mrf.mxu0
        %v264 = vadd.f32 0.0, %v263
        %v265 = vpop.f32.mrf.mxu0
        %v266 = vadd.f32 0.0, %v265
        %267 = vdwg.mxu0
        %268 = vmatprep.subr.bf16.mxu0 0
        %269 = vmatpush1.bf16.msra.mxu0 0
        %270 = vmatprep.subr.bf16.mxu0 0
        %271 = vmatpush1.bf16.msra.mxu0 0
        %272 = vmatprep.subr.bf16.mxu0 0
        %273 = vmatpush1.bf16.msra.mxu0 0
        %274 = vmatprep.subr.bf16.mxu0 0
        %275 = vmatpush1.bf16.msra.mxu0 0
        %276 = vmatprep.subr.bf16.mxu0 0
        %277 = vmatpush1.bf16.msra.mxu0 0
        %278 = vmatprep.subr.bf16.mxu0 0
        %279 = vmatpush1.bf16.msra.mxu0 0
        %280 = vmatprep.subr.bf16.mxu0 0
        %281 = vmatpush1.bf16.msra.mxu0 0
        %282 = vmatprep.subr.bf16.mxu0 0
        %283 = vmatpush1.bf16.msra.mxu0 %v223
        %284 = vmatprep.subr.bf16.mxu0 0
        %285 = vmatpush2.bf16.msra.mxu0 0
        %286 = vmatprep.subr.bf16.mxu0 0
        %287 = vmatpush2.bf16.msra.mxu0 0
        %288 = vmatprep.subr.bf16.mxu0 0
        %289 = vmatpush2.bf16.msra.mxu0 0
        %290 = vmatprep.subr.bf16.mxu0 0
        %291 = vmatpush2.bf16.msra.mxu0 0
        %292 = vmatprep.subr.bf16.mxu0 0
        %293 = vmatpush2.bf16.msra.mxu0 0
        %294 = vmatprep.subr.bf16.mxu0 0
        %295 = vmatpush2.bf16.msra.mxu0 0
        %296 = vmatprep.subr.bf16.mxu0 0
        %297 = vmatpush2.bf16.msra.mxu0 0
        %298 = vmatprep.subr.bf16.mxu0 0
        %299 = vmatpush2.bf16.msra.mxu0 0
        %300 = vmatprep.mubr.bf16.mxu0 0
        %301 = vmatmul.mubr.bf16.gmra.mxu0 %v213
        %v302 = vpop.f32.mrf.mxu0
        %v303 = vadd.f32 0.0, %v302
        %v304 = vpop.f32.mrf.mxu0
        %v305 = vpop.f32.mrf.mxu0
        %v306 = vadd.f32 0.0, %v305
        %v307 = vpop.f32.mrf.mxu0
        %308 = vdwg.mxu0
        %v311 = vunpack.c.l.b16 %v182
        %v312 = vunpack.c.l.b16 %v183
        %v313 = vpack.c.b16 %v312, %v311
        %v315 = vsel %vm211, %v313, 0
        %v318 = vsel %vm215, %v199, 0
        %v321 = vsel %vm215, %v200, 0
        %v324 = vsel %vm215, %v201, 0
        %326 = vmatprep.subr.bf16.mxu0 0
        %327 = vmatpush1.bf16.msra.mxu0 0
        %328 = vmatprep.subr.bf16.mxu0 0
        %329 = vmatpush1.bf16.msra.mxu0 0
        %330 = vmatprep.subr.bf16.mxu0 0
        %331 = vmatpush1.bf16.msra.mxu0 0
        %332 = vmatprep.subr.bf16.mxu0 0
        %333 = vmatpush1.bf16.msra.mxu0 0
        %334 = vmatprep.subr.bf16.mxu0 0
        %335 = vmatpush1.bf16.msra.mxu0 0
        %336 = vmatprep.subr.bf16.mxu0 0
        %337 = vmatpush1.bf16.msra.mxu0 0
        %338 = vmatprep.subr.bf16.mxu0 0
        %339 = vmatpush1.bf16.msra.mxu0 0
        %340 = vmatprep.subr.bf16.mxu0 %v321
        %341 = vmatpush1.bf16.msra.mxu0 %v318
        %342 = vmatprep.subr.bf16.mxu0 0
        %343 = vmatpush2.bf16.msra.mxu0 0
        %344 = vmatprep.subr.bf16.mxu0 0
        %345 = vmatpush2.bf16.msra.mxu0 0
        %346 = vmatprep.subr.bf16.mxu0 0
        %347 = vmatpush2.bf16.msra.mxu0 0
        %348 = vmatprep.subr.bf16.mxu0 0
        %349 = vmatpush2.bf16.msra.mxu0 0
        %350 = vmatprep.subr.bf16.mxu0 0
        %351 = vmatpush2.bf16.msra.mxu0 0
        %352 = vmatprep.subr.bf16.mxu0 0
        %353 = vmatpush2.bf16.msra.mxu0 0
        %354 = vmatprep.subr.bf16.mxu0 0
        %355 = vmatpush2.bf16.msra.mxu0 0
        %356 = vmatprep.subr.bf16.mxu0 0
        %357 = vmatpush2.bf16.msra.mxu0 0
        %358 = vmatprep.mubr.bf16.mxu0 0
        %359 = vmatmul.mubr.bf16.gmra.mxu0 %v315
        %v360 = vpop.f32.mrf.mxu0
        %v361 = vadd.f32 %v260, %v360
        %v362 = vpop.f32.mrf.mxu0
        %v363 = vadd.f32 %v262, %v362
        %v364 = vpop.f32.mrf.mxu0
        %v365 = vadd.f32 %v264, %v364
        %v366 = vpop.f32.mrf.mxu0
        %v367 = vadd.f32 %v266, %v366
        %368 = vdwg.mxu0
        %369 = vmatprep.subr.bf16.mxu0 0
        %370 = vmatpush1.bf16.msra.mxu0 0
        %371 = vmatprep.subr.bf16.mxu0 0
        %372 = vmatpush1.bf16.msra.mxu0 0
        %373 = vmatprep.subr.bf16.mxu0 0
        %374 = vmatpush1.bf16.msra.mxu0 0
        %375 = vmatprep.subr.bf16.mxu0 0
        %376 = vmatpush1.bf16.msra.mxu0 0
        %377 = vmatprep.subr.bf16.mxu0 0
        %378 = vmatpush1.bf16.msra.mxu0 0
        %379 = vmatprep.subr.bf16.mxu0 0
        %380 = vmatpush1.bf16.msra.mxu0 0
        %381 = vmatprep.subr.bf16.mxu0 0
        %382 = vmatpush1.bf16.msra.mxu0 0
        %383 = vmatprep.subr.bf16.mxu0 0
        %384 = vmatpush1.bf16.msra.mxu0 %v324
        %385 = vmatprep.subr.bf16.mxu0 0
        %386 = vmatpush2.bf16.msra.mxu0 0
        %387 = vmatprep.subr.bf16.mxu0 0
        %388 = vmatpush2.bf16.msra.mxu0 0
        %389 = vmatprep.subr.bf16.mxu0 0
        %390 = vmatpush2.bf16.msra.mxu0 0
        %391 = vmatprep.subr.bf16.mxu0 0
        %392 = vmatpush2.bf16.msra.mxu0 0
        %393 = vmatprep.subr.bf16.mxu0 0
        %394 = vmatpush2.bf16.msra.mxu0 0
        %395 = vmatprep.subr.bf16.mxu0 0
        %396 = vmatpush2.bf16.msra.mxu0 0
        %397 = vmatprep.subr.bf16.mxu0 0
        %398 = vmatpush2.bf16.msra.mxu0 0
        %399 = vmatprep.subr.bf16.mxu0 0
        %400 = vmatpush2.bf16.msra.mxu0 0
        %401 = vmatprep.mubr.bf16.mxu0 0
        %402 = vmatmul.mubr.bf16.gmra.mxu0 %v315
        %v403 = vpop.f32.mrf.mxu0
        %v404 = vadd.f32 %v303, %v403
        %v405 = vpop.f32.mrf.mxu0
        %v406 = vpop.f32.mrf.mxu0
        %v407 = vadd.f32 %v306, %v406
        %v408 = vpop.f32.mrf.mxu0
        %409 = vdwg.mxu0
        %s410 = scalar_lea.vmem %s1, 16
        %v411 = vld [vmem:[%s410] sm:$0xf]
        %v412 = vld [vmem:[%s410 + $0x4] sm:$0xf]
        %v415 = vunpack.c.l.b16 %v411
        %v416 = vunpack.c.l.b16 %v412
        %v417 = vpack.c.b16 %v416, %v415
        %418 = vrot.lane.b32.xlu0 %v199, 126
        %v419 = vpop.permute.xlu0 %418
        %420 = vrot.lane.b32.xlu0 %v200, 126
        %v421 = vpop.permute.xlu0 %420
        %422 = vrot.lane.b32.xlu0 %v201, 126
        %v423 = vpop.permute.xlu0 %422
        %vm424 = vcmask 1031168
        %v425 = vsel %vm424, %v419, %v421
        %v426 = vsel %vm424, %v421, %v423
        %v428 = vsel %vm211, %v417, 0
        %v431 = vsel %vm215, %v425, 0
        %v434 = vsel %vm215, %v426, 0
        %v437 = vsel %vm215, %v423, 0
        %439 = vmatprep.subr.bf16.mxu0 0
        %440 = vmatpush1.bf16.msra.mxu0 0
        %441 = vmatprep.subr.bf16.mxu0 0
        %442 = vmatpush1.bf16.msra.mxu0 0
        %443 = vmatprep.subr.bf16.mxu0 0
        %444 = vmatpush1.bf16.msra.mxu0 0
        %445 = vmatprep.subr.bf16.mxu0 0
        %446 = vmatpush1.bf16.msra.mxu0 0
        %447 = vmatprep.subr.bf16.mxu0 0
        %448 = vmatpush1.bf16.msra.mxu0 0
        %449 = vmatprep.subr.bf16.mxu0 0
        %450 = vmatpush1.bf16.msra.mxu0 0
        %451 = vmatprep.subr.bf16.mxu0 0
        %452 = vmatpush1.bf16.msra.mxu0 0
        %453 = vmatprep.subr.bf16.mxu0 %v434
        %454 = vmatpush1.bf16.msra.mxu0 %v431
        %455 = vmatprep.subr.bf16.mxu0 0
        %456 = vmatpush2.bf16.msra.mxu0 0
        %457 = vmatprep.subr.bf16.mxu0 0
        %458 = vmatpush2.bf16.msra.mxu0 0
        %459 = vmatprep.subr.bf16.mxu0 0
        %460 = vmatpush2.bf16.msra.mxu0 0
        %461 = vmatprep.subr.bf16.mxu0 0
        %462 = vmatpush2.bf16.msra.mxu0 0
        %463 = vmatprep.subr.bf16.mxu0 0
        %464 = vmatpush2.bf16.msra.mxu0 0
        %465 = vmatprep.subr.bf16.mxu0 0
        %466 = vmatpush2.bf16.msra.mxu0 0
        %467 = vmatprep.subr.bf16.mxu0 0
        %468 = vmatpush2.bf16.msra.mxu0 0
        %469 = vmatprep.subr.bf16.mxu0 0
        %470 = vmatpush2.bf16.msra.mxu0 0
        %471 = vmatprep.mubr.bf16.mxu0 0
        %472 = vmatmul.mubr.bf16.gmra.mxu0 %v428
        %v473 = vpop.f32.mrf.mxu0
        %v474 = vadd.f32 0.0, %v473
        %v475 = vpop.f32.mrf.mxu0
        %v476 = vadd.f32 0.0, %v475
        %v477 = vpop.f32.mrf.mxu0
        %v478 = vadd.f32 0.0, %v477
        %v479 = vpop.f32.mrf.mxu0
        %v480 = vadd.f32 0.0, %v479
        %481 = vdwg.mxu0
        %482 = vmatprep.subr.bf16.mxu0 0
        %483 = vmatpush1.bf16.msra.mxu0 0
        %484 = vmatprep.subr.bf16.mxu0 0
        %485 = vmatpush1.bf16.msra.mxu0 0
        %486 = vmatprep.subr.bf16.mxu0 0
        %487 = vmatpush1.bf16.msra.mxu0 0
        %488 = vmatprep.subr.bf16.mxu0 0
        %489 = vmatpush1.bf16.msra.mxu0 0
        %490 = vmatprep.subr.bf16.mxu0 0
        %491 = vmatpush1.bf16.msra.mxu0 0
        %492 = vmatprep.subr.bf16.mxu0 0
        %493 = vmatpush1.bf16.msra.mxu0 0
        %494 = vmatprep.subr.bf16.mxu0 0
        %495 = vmatpush1.bf16.msra.mxu0 0
        %496 = vmatprep.subr.bf16.mxu0 0
        %497 = vmatpush1.bf16.msra.mxu0 %v437
        %498 = vmatprep.subr.bf16.mxu0 0
        %499 = vmatpush2.bf16.msra.mxu0 0
        %500 = vmatprep.subr.bf16.mxu0 0
        %501 = vmatpush2.bf16.msra.mxu0 0
        %502 = vmatprep.subr.bf16.mxu0 0
        %503 = vmatpush2.bf16.msra.mxu0 0
        %504 = vmatprep.subr.bf16.mxu0 0
        %505 = vmatpush2.bf16.msra.mxu0 0
        %506 = vmatprep.subr.bf16.mxu0 0
        %507 = vmatpush2.bf16.msra.mxu0 0
        %508 = vmatprep.subr.bf16.mxu0 0
        %509 = vmatpush2.bf16.msra.mxu0 0
        %510 = vmatprep.subr.bf16.mxu0 0
        %511 = vmatpush2.bf16.msra.mxu0 0
        %512 = vmatprep.subr.bf16.mxu0 0
        %513 = vmatpush2.bf16.msra.mxu0 0
        %514 = vmatprep.mubr.bf16.mxu0 0
        %515 = vmatmul.mubr.bf16.gmra.mxu0 %v428
        %v516 = vpop.f32.mrf.mxu0
        %v517 = vadd.f32 0.0, %v516
        %v518 = vpop.f32.mrf.mxu0
        %v519 = vpop.f32.mrf.mxu0
        %v520 = vadd.f32 0.0, %v519
        %v521 = vpop.f32.mrf.mxu0
        %522 = vdwg.mxu0
        %v523 = vadd.f32 %v361, %v474
        %v524 = vadd.f32 %v363, %v476
        %v525 = vadd.f32 %v404, %v517
        %v526 = vadd.f32 %v365, %v478
        %v527 = vadd.f32 %v367, %v480
        %v528 = vadd.f32 %v407, %v520
        %s529 = scalar_lea.vmem %s1, 24
        %v530 = vld [vmem:[%s529] sm:$0xf]
        %v531 = vld [vmem:[%s529 + $0x4] sm:$0xf]
        %v534 = vunpack.c.l.b16 %v530
        %v535 = vunpack.c.l.b16 %v531
        %v536 = vpack.c.b16 %v535, %v534
        %537 = vrot.lane.b32.xlu0 %v199, 110
        %v538 = vpop.permute.xlu0 %537
        %539 = vrot.lane.b32.xlu0 %v200, 110
        %v540 = vpop.permute.xlu0 %539
        %541 = vrot.lane.b32.xlu0 %v201, 110
        %v542 = vpop.permute.xlu0 %541
        %vm543 = vcmask 900096
        %v544 = vsel %vm543, %v538, %v540
        %v545 = vsel %vm543, %v540, %v542
        %v547 = vsel %vm211, %v536, 0
        %v550 = vsel %vm215, %v544, 0
        %v553 = vsel %vm215, %v545, 0
        %v556 = vsel %vm215, %v542, 0
        %558 = vmatprep.subr.bf16.mxu0 0
        %559 = vmatpush1.bf16.msra.mxu0 0
        %560 = vmatprep.subr.bf16.mxu0 0
        %561 = vmatpush1.bf16.msra.mxu0 0
        %562 = vmatprep.subr.bf16.mxu0 0
        %563 = vmatpush1.bf16.msra.mxu0 0
        %564 = vmatprep.subr.bf16.mxu0 0
        %565 = vmatpush1.bf16.msra.mxu0 0
        %566 = vmatprep.subr.bf16.mxu0 0
        %567 = vmatpush1.bf16.msra.mxu0 0
        %568 = vmatprep.subr.bf16.mxu0 0
        %569 = vmatpush1.bf16.msra.mxu0 0
        %570 = vmatprep.subr.bf16.mxu0 0
        %571 = vmatpush1.bf16.msra.mxu0 0
        %572 = vmatprep.subr.bf16.mxu0 %v553
        %573 = vmatpush1.bf16.msra.mxu0 %v550
        %574 = vmatprep.subr.bf16.mxu0 0
        %575 = vmatpush2.bf16.msra.mxu0 0
        %576 = vmatprep.subr.bf16.mxu0 0
        %577 = vmatpush2.bf16.msra.mxu0 0
        %578 = vmatprep.subr.bf16.mxu0 0
        %579 = vmatpush2.bf16.msra.mxu0 0
        %580 = vmatprep.subr.bf16.mxu0 0
        %581 = vmatpush2.bf16.msra.mxu0 0
        %582 = vmatprep.subr.bf16.mxu0 0
        %583 = vmatpush2.bf16.msra.mxu0 0
        %584 = vmatprep.subr.bf16.mxu0 0
        %585 = vmatpush2.bf16.msra.mxu0 0
        %586 = vmatprep.subr.bf16.mxu0 0
        %587 = vmatpush2.bf16.msra.mxu0 0
        %588 = vmatprep.subr.bf16.mxu0 0
        %589 = vmatpush2.bf16.msra.mxu0 0
        %590 = vmatprep.mubr.bf16.mxu0 0
        %591 = vmatmul.mubr.bf16.gmra.mxu0 %v547
        %v592 = vpop.f32.mrf.mxu0
        %v593 = vadd.f32 0.0, %v592
        %v594 = vpop.f32.mrf.mxu0
        %v595 = vadd.f32 0.0, %v594
        %v596 = vpop.f32.mrf.mxu0
        %v597 = vadd.f32 0.0, %v596
        %v598 = vpop.f32.mrf.mxu0
        %v599 = vadd.f32 0.0, %v598
        %600 = vdwg.mxu0
        %601 = vmatprep.subr.bf16.mxu0 0
        %602 = vmatpush1.bf16.msra.mxu0 0
        %603 = vmatprep.subr.bf16.mxu0 0
        %604 = vmatpush1.bf16.msra.mxu0 0
        %605 = vmatprep.subr.bf16.mxu0 0
        %606 = vmatpush1.bf16.msra.mxu0 0
        %607 = vmatprep.subr.bf16.mxu0 0
        %608 = vmatpush1.bf16.msra.mxu0 0
        %609 = vmatprep.subr.bf16.mxu0 0
        %610 = vmatpush1.bf16.msra.mxu0 0
        %611 = vmatprep.subr.bf16.mxu0 0
        %612 = vmatpush1.bf16.msra.mxu0 0
        %613 = vmatprep.subr.bf16.mxu0 0
        %614 = vmatpush1.bf16.msra.mxu0 0
        %615 = vmatprep.subr.bf16.mxu0 0
        %616 = vmatpush1.bf16.msra.mxu0 %v556
        %617 = vmatprep.subr.bf16.mxu0 0
        %618 = vmatpush2.bf16.msra.mxu0 0
        %619 = vmatprep.subr.bf16.mxu0 0
        %620 = vmatpush2.bf16.msra.mxu0 0
        %621 = vmatprep.subr.bf16.mxu0 0
        %622 = vmatpush2.bf16.msra.mxu0 0
        %623 = vmatprep.subr.bf16.mxu0 0
        %624 = vmatpush2.bf16.msra.mxu0 0
        %625 = vmatprep.subr.bf16.mxu0 0
        %626 = vmatpush2.bf16.msra.mxu0 0
        %627 = vmatprep.subr.bf16.mxu0 0
        %628 = vmatpush2.bf16.msra.mxu0 0
        %629 = vmatprep.subr.bf16.mxu0 0
        %630 = vmatpush2.bf16.msra.mxu0 0
        %631 = vmatprep.subr.bf16.mxu0 0
        %632 = vmatpush2.bf16.msra.mxu0 0
        %633 = vmatprep.mubr.bf16.mxu0 0
        %634 = vmatmul.mubr.bf16.gmra.mxu0 %v547
        %v635 = vpop.f32.mrf.mxu0
        %v636 = vadd.f32 0.0, %v635
        %v637 = vpop.f32.mrf.mxu0
        %v638 = vpop.f32.mrf.mxu0
        %v639 = vadd.f32 0.0, %v638
        %v640 = vpop.f32.mrf.mxu0
        %641 = vdwg.mxu0
        %v642 = vadd.f32 %v523, %v593
        %v643 = vadd.f32 %v524, %v595
        %v644 = vadd.f32 %v525, %v636
        %v645 = vadd.f32 %v526, %v597
        %v646 = vadd.f32 %v527, %v599
        %v647 = vadd.f32 %v528, %v639
        %s648 = scalar_lea.vmem %s1, 32
        %v649 = vld [vmem:[%s648] sm:$0xf]
        %v650 = vld [vmem:[%s648 + $0x4] sm:$0xf]
        %v653 = vunpack.c.l.b16 %v649
        %v654 = vunpack.c.l.b16 %v650
        %v655 = vpack.c.b16 %v654, %v653
        %656 = vrot.lane.b32.xlu0 %v199, 109
        %v657 = vpop.permute.xlu0 %656
        %658 = vrot.lane.b32.xlu0 %v200, 109
        %v659 = vpop.permute.xlu0 %658
        %660 = vrot.lane.b32.xlu0 %v201, 109
        %v661 = vpop.permute.xlu0 %660
        %vm662 = vcmask 891904
        %v663 = vsel %vm662, %v657, %v659
        %v664 = vsel %vm662, %v659, %v661
        %v666 = vsel %vm211, %v655, 0
        %v669 = vsel %vm215, %v663, 0
        %v672 = vsel %vm215, %v664, 0
        %v675 = vsel %vm215, %v661, 0
        %677 = vmatprep.subr.bf16.mxu0 0
        %678 = vmatpush1.bf16.msra.mxu0 0
        %679 = vmatprep.subr.bf16.mxu0 0
        %680 = vmatpush1.bf16.msra.mxu0 0
        %681 = vmatprep.subr.bf16.mxu0 0
        %682 = vmatpush1.bf16.msra.mxu0 0
        %683 = vmatprep.subr.bf16.mxu0 0
        %684 = vmatpush1.bf16.msra.mxu0 0
        %685 = vmatprep.subr.bf16.mxu0 0
        %686 = vmatpush1.bf16.msra.mxu0 0
        %687 = vmatprep.subr.bf16.mxu0 0
        %688 = vmatpush1.bf16.msra.mxu0 0
        %689 = vmatprep.subr.bf16.mxu0 0
        %690 = vmatpush1.bf16.msra.mxu0 0
        %691 = vmatprep.subr.bf16.mxu0 %v672
        %692 = vmatpush1.bf16.msra.mxu0 %v669
        %693 = vmatprep.subr.bf16.mxu0 0
        %694 = vmatpush2.bf16.msra.mxu0 0
        %695 = vmatprep.subr.bf16.mxu0 0
        %696 = vmatpush2.bf16.msra.mxu0 0
        %697 = vmatprep.subr.bf16.mxu0 0
        %698 = vmatpush2.bf16.msra.mxu0 0
        %699 = vmatprep.subr.bf16.mxu0 0
        %700 = vmatpush2.bf16.msra.mxu0 0
        %701 = vmatprep.subr.bf16.mxu0 0
        %702 = vmatpush2.bf16.msra.mxu0 0
        %703 = vmatprep.subr.bf16.mxu0 0
        %704 = vmatpush2.bf16.msra.mxu0 0
        %705 = vmatprep.subr.bf16.mxu0 0
        %706 = vmatpush2.bf16.msra.mxu0 0
        %707 = vmatprep.subr.bf16.mxu0 0
        %708 = vmatpush2.bf16.msra.mxu0 0
        %709 = vmatprep.mubr.bf16.mxu0 0
        %710 = vmatmul.mubr.bf16.gmra.mxu0 %v666
        %v711 = vpop.f32.mrf.mxu0
        %v712 = vadd.f32 0.0, %v711
        %v713 = vpop.f32.mrf.mxu0
        %v714 = vadd.f32 0.0, %v713
        %v715 = vpop.f32.mrf.mxu0
        %v716 = vadd.f32 0.0, %v715
        %v717 = vpop.f32.mrf.mxu0
        %v718 = vadd.f32 0.0, %v717
        %719 = vdwg.mxu0
        %720 = vmatprep.subr.bf16.mxu0 0
        %721 = vmatpush1.bf16.msra.mxu0 0
        %722 = vmatprep.subr.bf16.mxu0 0
        %723 = vmatpush1.bf16.msra.mxu0 0
        %724 = vmatprep.subr.bf16.mxu0 0
        %725 = vmatpush1.bf16.msra.mxu0 0
        %726 = vmatprep.subr.bf16.mxu0 0
        %727 = vmatpush1.bf16.msra.mxu0 0
        %728 = vmatprep.subr.bf16.mxu0 0
        %729 = vmatpush1.bf16.msra.mxu0 0
        %730 = vmatprep.subr.bf16.mxu0 0
        %731 = vmatpush1.bf16.msra.mxu0 0
        %732 = vmatprep.subr.bf16.mxu0 0
        %733 = vmatpush1.bf16.msra.mxu0 0
        %734 = vmatprep.subr.bf16.mxu0 0
        %735 = vmatpush1.bf16.msra.mxu0 %v675
        %736 = vmatprep.subr.bf16.mxu0 0
        %737 = vmatpush2.bf16.msra.mxu0 0
        %738 = vmatprep.subr.bf16.mxu0 0
        %739 = vmatpush2.bf16.msra.mxu0 0
        %740 = vmatprep.subr.bf16.mxu0 0
        %741 = vmatpush2.bf16.msra.mxu0 0
        %742 = vmatprep.subr.bf16.mxu0 0
        %743 = vmatpush2.bf16.msra.mxu0 0
        %744 = vmatprep.subr.bf16.mxu0 0
        %745 = vmatpush2.bf16.msra.mxu0 0
        %746 = vmatprep.subr.bf16.mxu0 0
        %747 = vmatpush2.bf16.msra.mxu0 0
        %748 = vmatprep.subr.bf16.mxu0 0
        %749 = vmatpush2.bf16.msra.mxu0 0
        %750 = vmatprep.subr.bf16.mxu0 0
        %751 = vmatpush2.bf16.msra.mxu0 0
        %752 = vmatprep.mubr.bf16.mxu0 0
        %753 = vmatmul.mubr.bf16.gmra.mxu0 %v666
        %v754 = vpop.f32.mrf.mxu0
        %v755 = vadd.f32 0.0, %v754
        %v756 = vpop.f32.mrf.mxu0
        %v757 = vpop.f32.mrf.mxu0
        %v758 = vadd.f32 0.0, %v757
        %v759 = vpop.f32.mrf.mxu0
        %760 = vdwg.mxu0
        %v761 = vadd.f32 %v642, %v712
        %v762 = vadd.f32 %v643, %v714
        %v763 = vadd.f32 %v644, %v755
        %v764 = vadd.f32 %v645, %v716
        %v765 = vadd.f32 %v646, %v718
        %v766 = vadd.f32 %v647, %v758
        %s767 = scalar_lea.vmem %s1, 40
        %v768 = vld [vmem:[%s767] sm:$0xf]
        %v769 = vld [vmem:[%s767 + $0x4] sm:$0xf]
        %v772 = vunpack.c.l.b16 %v768
        %v773 = vunpack.c.l.b16 %v769
        %v774 = vpack.c.b16 %v773, %v772
        %775 = vrot.lane.b32.xlu0 %v199, 108
        %v776 = vpop.permute.xlu0 %775
        %777 = vrot.lane.b32.xlu0 %v200, 108
        %v778 = vpop.permute.xlu0 %777
        %779 = vrot.lane.b32.xlu0 %v201, 108
        %v780 = vpop.permute.xlu0 %779
        %vm781 = vcmask 883712
        %v782 = vsel %vm781, %v776, %v778
        %v783 = vsel %vm781, %v778, %v780
        %v785 = vsel %vm211, %v774, 0
        %v788 = vsel %vm215, %v782, 0
        %v791 = vsel %vm215, %v783, 0
        %v794 = vsel %vm215, %v780, 0
        %796 = vmatprep.subr.bf16.mxu0 0
        %797 = vmatpush1.bf16.msra.mxu0 0
        %798 = vmatprep.subr.bf16.mxu0 0
        %799 = vmatpush1.bf16.msra.mxu0 0
        %800 = vmatprep.subr.bf16.mxu0 0
        %801 = vmatpush1.bf16.msra.mxu0 0
        %802 = vmatprep.subr.bf16.mxu0 0
        %803 = vmatpush1.bf16.msra.mxu0 0
        %804 = vmatprep.subr.bf16.mxu0 0
        %805 = vmatpush1.bf16.msra.mxu0 0
        %806 = vmatprep.subr.bf16.mxu0 0
        %807 = vmatpush1.bf16.msra.mxu0 0
        %808 = vmatprep.subr.bf16.mxu0 0
        %809 = vmatpush1.bf16.msra.mxu0 0
        %810 = vmatprep.subr.bf16.mxu0 %v791
        %811 = vmatpush1.bf16.msra.mxu0 %v788
        %812 = vmatprep.subr.bf16.mxu0 0
        %813 = vmatpush2.bf16.msra.mxu0 0
        %814 = vmatprep.subr.bf16.mxu0 0
        %815 = vmatpush2.bf16.msra.mxu0 0
        %816 = vmatprep.subr.bf16.mxu0 0
        %817 = vmatpush2.bf16.msra.mxu0 0
        %818 = vmatprep.subr.bf16.mxu0 0
        %819 = vmatpush2.bf16.msra.mxu0 0
        %820 = vmatprep.subr.bf16.mxu0 0
        %821 = vmatpush2.bf16.msra.mxu0 0
        %822 = vmatprep.subr.bf16.mxu0 0
        %823 = vmatpush2.bf16.msra.mxu0 0
        %824 = vmatprep.subr.bf16.mxu0 0
        %825 = vmatpush2.bf16.msra.mxu0 0
        %826 = vmatprep.subr.bf16.mxu0 0
        %827 = vmatpush2.bf16.msra.mxu0 0
        %828 = vmatprep.mubr.bf16.mxu0 0
        %829 = vmatmul.mubr.bf16.gmra.mxu0 %v785
        %v830 = vpop.f32.mrf.mxu0
        %v831 = vadd.f32 0.0, %v830
        %v832 = vpop.f32.mrf.mxu0
        %v833 = vadd.f32 0.0, %v832
        %v834 = vpop.f32.mrf.mxu0
        %v835 = vadd.f32 0.0, %v834
        %v836 = vpop.f32.mrf.mxu0
        %v837 = vadd.f32 0.0, %v836
        %838 = vdwg.mxu0
        %839 = vmatprep.subr.bf16.mxu0 0
        %840 = vmatpush1.bf16.msra.mxu0 0
        %841 = vmatprep.subr.bf16.mxu0 0
        %842 = vmatpush1.bf16.msra.mxu0 0
        %843 = vmatprep.subr.bf16.mxu0 0
        %844 = vmatpush1.bf16.msra.mxu0 0
        %845 = vmatprep.subr.bf16.mxu0 0
        %846 = vmatpush1.bf16.msra.mxu0 0
        %847 = vmatprep.subr.bf16.mxu0 0
        %848 = vmatpush1.bf16.msra.mxu0 0
        %849 = vmatprep.subr.bf16.mxu0 0
        %850 = vmatpush1.bf16.msra.mxu0 0
        %851 = vmatprep.subr.bf16.mxu0 0
        %852 = vmatpush1.bf16.msra.mxu0 0
        %853 = vmatprep.subr.bf16.mxu0 0
        %854 = vmatpush1.bf16.msra.mxu0 %v794
        %855 = vmatprep.subr.bf16.mxu0 0
        %856 = vmatpush2.bf16.msra.mxu0 0
        %857 = vmatprep.subr.bf16.mxu0 0
        %858 = vmatpush2.bf16.msra.mxu0 0
        %859 = vmatprep.subr.bf16.mxu0 0
        %860 = vmatpush2.bf16.msra.mxu0 0
        %861 = vmatprep.subr.bf16.mxu0 0
        %862 = vmatpush2.bf16.msra.mxu0 0
        %863 = vmatprep.subr.bf16.mxu0 0
        %864 = vmatpush2.bf16.msra.mxu0 0
        %865 = vmatprep.subr.bf16.mxu0 0
        %866 = vmatpush2.bf16.msra.mxu0 0
        %867 = vmatprep.subr.bf16.mxu0 0
        %868 = vmatpush2.bf16.msra.mxu0 0
        %869 = vmatprep.subr.bf16.mxu0 0
        %870 = vmatpush2.bf16.msra.mxu0 0
        %871 = vmatprep.mubr.bf16.mxu0 0
        %872 = vmatmul.mubr.bf16.gmra.mxu0 %v785
        %v873 = vpop.f32.mrf.mxu0
        %v874 = vadd.f32 0.0, %v873
        %v875 = vpop.f32.mrf.mxu0
        %v876 = vpop.f32.mrf.mxu0
        %v877 = vadd.f32 0.0, %v876
        %v878 = vpop.f32.mrf.mxu0
        %879 = vdwg.mxu0
        %v880 = vadd.f32 %v761, %v831
        %v881 = vadd.f32 %v762, %v833
        %v882 = vadd.f32 %v763, %v874
        %v883 = vadd.f32 %v764, %v835
        %v884 = vadd.f32 %v765, %v837
        %v885 = vadd.f32 %v766, %v877
        %s886 = scalar_lea.vmem %s1, 48
        %v887 = vld [vmem:[%s886] sm:$0xf]
        %v888 = vld [vmem:[%s886 + $0x4] sm:$0xf]
        %v891 = vunpack.c.l.b16 %v887
        %v892 = vunpack.c.l.b16 %v888
        %v893 = vpack.c.b16 %v892, %v891
        %894 = vrot.lane.b32.xlu0 %v199, 92
        %v895 = vpop.permute.xlu0 %894
        %896 = vrot.lane.b32.xlu0 %v200, 92
        %v897 = vpop.permute.xlu0 %896
        %898 = vrot.lane.b32.xlu0 %v201, 92
        %v899 = vpop.permute.xlu0 %898
        %vm900 = vcmask 752640
        %v901 = vsel %vm900, %v895, %v897
        %v902 = vsel %vm900, %v897, %v899
        %v904 = vsel %vm211, %v893, 0
        %v907 = vsel %vm215, %v901, 0
        %v910 = vsel %vm215, %v902, 0
        %v913 = vsel %vm215, %v899, 0
        %915 = vmatprep.subr.bf16.mxu0 0
        %916 = vmatpush1.bf16.msra.mxu0 0
        %917 = vmatprep.subr.bf16.mxu0 0
        %918 = vmatpush1.bf16.msra.mxu0 0
        %919 = vmatprep.subr.bf16.mxu0 0
        %920 = vmatpush1.bf16.msra.mxu0 0
        %921 = vmatprep.subr.bf16.mxu0 0
        %922 = vmatpush1.bf16.msra.mxu0 0
        %923 = vmatprep.subr.bf16.mxu0 0
        %924 = vmatpush1.bf16.msra.mxu0 0
        %925 = vmatprep.subr.bf16.mxu0 0
        %926 = vmatpush1.bf16.msra.mxu0 0
        %927 = vmatprep.subr.bf16.mxu0 0
        %928 = vmatpush1.bf16.msra.mxu0 0
        %929 = vmatprep.subr.bf16.mxu0 %v910
        %930 = vmatpush1.bf16.msra.mxu0 %v907
        %931 = vmatprep.subr.bf16.mxu0 0
        %932 = vmatpush2.bf16.msra.mxu0 0
        %933 = vmatprep.subr.bf16.mxu0 0
        %934 = vmatpush2.bf16.msra.mxu0 0
        %935 = vmatprep.subr.bf16.mxu0 0
        %936 = vmatpush2.bf16.msra.mxu0 0
        %937 = vmatprep.subr.bf16.mxu0 0
        %938 = vmatpush2.bf16.msra.mxu0 0
        %939 = vmatprep.subr.bf16.mxu0 0
        %940 = vmatpush2.bf16.msra.mxu0 0
        %941 = vmatprep.subr.bf16.mxu0 0
        %942 = vmatpush2.bf16.msra.mxu0 0
        %943 = vmatprep.subr.bf16.mxu0 0
        %944 = vmatpush2.bf16.msra.mxu0 0
        %945 = vmatprep.subr.bf16.mxu0 0
        %946 = vmatpush2.bf16.msra.mxu0 0
        %947 = vmatprep.mubr.bf16.mxu0 0
        %948 = vmatmul.mubr.bf16.gmra.mxu0 %v904
        %v949 = vpop.f32.mrf.mxu0
        %v950 = vadd.f32 0.0, %v949
        %v951 = vpop.f32.mrf.mxu0
        %v952 = vadd.f32 0.0, %v951
        %v953 = vpop.f32.mrf.mxu0
        %v954 = vadd.f32 0.0, %v953
        %v955 = vpop.f32.mrf.mxu0
        %v956 = vadd.f32 0.0, %v955
        %957 = vdwg.mxu0
        %958 = vmatprep.subr.bf16.mxu0 0
        %959 = vmatpush1.bf16.msra.mxu0 0
        %960 = vmatprep.subr.bf16.mxu0 0
        %961 = vmatpush1.bf16.msra.mxu0 0
        %962 = vmatprep.subr.bf16.mxu0 0
        %963 = vmatpush1.bf16.msra.mxu0 0
        %964 = vmatprep.subr.bf16.mxu0 0
        %965 = vmatpush1.bf16.msra.mxu0 0
        %966 = vmatprep.subr.bf16.mxu0 0
        %967 = vmatpush1.bf16.msra.mxu0 0
        %968 = vmatprep.subr.bf16.mxu0 0
        %969 = vmatpush1.bf16.msra.mxu0 0
        %970 = vmatprep.subr.bf16.mxu0 0
        %971 = vmatpush1.bf16.msra.mxu0 0
        %972 = vmatprep.subr.bf16.mxu0 0
        %973 = vmatpush1.bf16.msra.mxu0 %v913
        %974 = vmatprep.subr.bf16.mxu0 0
        %975 = vmatpush2.bf16.msra.mxu0 0
        %976 = vmatprep.subr.bf16.mxu0 0
        %977 = vmatpush2.bf16.msra.mxu0 0
        %978 = vmatprep.subr.bf16.mxu0 0
        %979 = vmatpush2.bf16.msra.mxu0 0
        %980 = vmatprep.subr.bf16.mxu0 0
        %981 = vmatpush2.bf16.msra.mxu0 0
        %982 = vmatprep.subr.bf16.mxu0 0
        %983 = vmatpush2.bf16.msra.mxu0 0
        %984 = vmatprep.subr.bf16.mxu0 0
        %985 = vmatpush2.bf16.msra.mxu0 0
        %986 = vmatprep.subr.bf16.mxu0 0
        %987 = vmatpush2.bf16.msra.mxu0 0
        %988 = vmatprep.subr.bf16.mxu0 0
        %989 = vmatpush2.bf16.msra.mxu0 0
        %990 = vmatprep.mubr.bf16.mxu0 0
        %991 = vmatmul.mubr.bf16.gmra.mxu0 %v904
        %v992 = vpop.f32.mrf.mxu0
        %v993 = vadd.f32 0.0, %v992
        %v994 = vpop.f32.mrf.mxu0
        %v995 = vpop.f32.mrf.mxu0
        %v996 = vadd.f32 0.0, %v995
        %v997 = vpop.f32.mrf.mxu0
        %998 = vdwg.mxu0
        %v999 = vadd.f32 %v880, %v950
        %v1000 = vadd.f32 %v881, %v952
        %v1001 = vadd.f32 %v882, %v993
        %v1002 = vadd.f32 %v883, %v954
        %v1003 = vadd.f32 %v884, %v956
        %v1004 = vadd.f32 %v885, %v996
        %s1005 = scalar_lea.vmem %s1, 56
        %v1006 = vld [vmem:[%s1005] sm:$0xf]
        %v1007 = vld [vmem:[%s1005 + $0x4] sm:$0xf]
        %v1010 = vunpack.c.l.b16 %v1006
        %v1011 = vunpack.c.l.b16 %v1007
        %v1012 = vpack.c.b16 %v1011, %v1010
        %1013 = vrot.lane.b32.xlu0 %v199, 91
        %v1014 = vpop.permute.xlu0 %1013
        %1015 = vrot.lane.b32.xlu0 %v200, 91
        %v1016 = vpop.permute.xlu0 %1015
        %1017 = vrot.lane.b32.xlu0 %v201, 91
        %v1018 = vpop.permute.xlu0 %1017
        %vm1019 = vcmask 744448
        %v1020 = vsel %vm1019, %v1014, %v1016
        %v1021 = vsel %vm1019, %v1016, %v1018
        %v1023 = vsel %vm211, %v1012, 0
        %v1026 = vsel %vm215, %v1020, 0
        %v1029 = vsel %vm215, %v1021, 0
        %v1032 = vsel %vm215, %v1018, 0
        %1034 = vmatprep.subr.bf16.mxu0 0
        %1035 = vmatpush1.bf16.msra.mxu0 0
        %1036 = vmatprep.subr.bf16.mxu0 0
        %1037 = vmatpush1.bf16.msra.mxu0 0
        %1038 = vmatprep.subr.bf16.mxu0 0
        %1039 = vmatpush1.bf16.msra.mxu0 0
        %1040 = vmatprep.subr.bf16.mxu0 0
        %1041 = vmatpush1.bf16.msra.mxu0 0
        %1042 = vmatprep.subr.bf16.mxu0 0
        %1043 = vmatpush1.bf16.msra.mxu0 0
        %1044 = vmatprep.subr.bf16.mxu0 0
        %1045 = vmatpush1.bf16.msra.mxu0 0
        %1046 = vmatprep.subr.bf16.mxu0 0
        %1047 = vmatpush1.bf16.msra.mxu0 0
        %1048 = vmatprep.subr.bf16.mxu0 %v1029
        %1049 = vmatpush1.bf16.msra.mxu0 %v1026
        %1050 = vmatprep.subr.bf16.mxu0 0
        %1051 = vmatpush2.bf16.msra.mxu0 0
        %1052 = vmatprep.subr.bf16.mxu0 0
        %1053 = vmatpush2.bf16.msra.mxu0 0
        %1054 = vmatprep.subr.bf16.mxu0 0
        %1055 = vmatpush2.bf16.msra.mxu0 0
        %1056 = vmatprep.subr.bf16.mxu0 0
        %1057 = vmatpush2.bf16.msra.mxu0 0
        %1058 = vmatprep.subr.bf16.mxu0 0
        %1059 = vmatpush2.bf16.msra.mxu0 0
        %1060 = vmatprep.subr.bf16.mxu0 0
        %1061 = vmatpush2.bf16.msra.mxu0 0
        %1062 = vmatprep.subr.bf16.mxu0 0
        %1063 = vmatpush2.bf16.msra.mxu0 0
        %1064 = vmatprep.subr.bf16.mxu0 0
        %1065 = vmatpush2.bf16.msra.mxu0 0
        %1066 = vmatprep.mubr.bf16.mxu0 0
        %1067 = vmatmul.mubr.bf16.gmra.mxu0 %v1023
        %v1068 = vpop.f32.mrf.mxu0
        %v1069 = vadd.f32 0.0, %v1068
        %v1070 = vpop.f32.mrf.mxu0
        %v1071 = vadd.f32 0.0, %v1070
        %v1072 = vpop.f32.mrf.mxu0
        %v1073 = vadd.f32 0.0, %v1072
        %v1074 = vpop.f32.mrf.mxu0
        %v1075 = vadd.f32 0.0, %v1074
        %1076 = vdwg.mxu0
        %1077 = vmatprep.subr.bf16.mxu0 0
        %1078 = vmatpush1.bf16.msra.mxu0 0
        %1079 = vmatprep.subr.bf16.mxu0 0
        %1080 = vmatpush1.bf16.msra.mxu0 0
        %1081 = vmatprep.subr.bf16.mxu0 0
        %1082 = vmatpush1.bf16.msra.mxu0 0
        %1083 = vmatprep.subr.bf16.mxu0 0
        %1084 = vmatpush1.bf16.msra.mxu0 0
        %1085 = vmatprep.subr.bf16.mxu0 0
        %1086 = vmatpush1.bf16.msra.mxu0 0
        %1087 = vmatprep.subr.bf16.mxu0 0
        %1088 = vmatpush1.bf16.msra.mxu0 0
        %1089 = vmatprep.subr.bf16.mxu0 0
        %1090 = vmatpush1.bf16.msra.mxu0 0
        %1091 = vmatprep.subr.bf16.mxu0 0
        %1092 = vmatpush1.bf16.msra.mxu0 %v1032
        %1093 = vmatprep.subr.bf16.mxu0 0
        %1094 = vmatpush2.bf16.msra.mxu0 0
        %1095 = vmatprep.subr.bf16.mxu0 0
        %1096 = vmatpush2.bf16.msra.mxu0 0
        %1097 = vmatprep.subr.bf16.mxu0 0
        %1098 = vmatpush2.bf16.msra.mxu0 0
        %1099 = vmatprep.subr.bf16.mxu0 0
        %1100 = vmatpush2.bf16.msra.mxu0 0
        %1101 = vmatprep.subr.bf16.mxu0 0
        %1102 = vmatpush2.bf16.msra.mxu0 0
        %1103 = vmatprep.subr.bf16.mxu0 0
        %1104 = vmatpush2.bf16.msra.mxu0 0
        %1105 = vmatprep.subr.bf16.mxu0 0
        %1106 = vmatpush2.bf16.msra.mxu0 0
        %1107 = vmatprep.subr.bf16.mxu0 0
        %1108 = vmatpush2.bf16.msra.mxu0 0
        %1109 = vmatprep.mubr.bf16.mxu0 0
        %1110 = vmatmul.mubr.bf16.gmra.mxu0 %v1023
        %v1111 = vpop.f32.mrf.mxu0
        %v1112 = vadd.f32 0.0, %v1111
        %v1113 = vpop.f32.mrf.mxu0
        %v1114 = vpop.f32.mrf.mxu0
        %v1115 = vadd.f32 0.0, %v1114
        %v1116 = vpop.f32.mrf.mxu0
        %1117 = vdwg.mxu0
        %v1118 = vadd.f32 %v999, %v1069
        %v1119 = vadd.f32 %v1000, %v1071
        %v1120 = vadd.f32 %v1001, %v1112
        %v1121 = vadd.f32 %v1002, %v1073
        %v1122 = vadd.f32 %v1003, %v1075
        %v1123 = vadd.f32 %v1004, %v1115
        %s1124 = scalar_lea.vmem %s1, 64
        %v1125 = vld [vmem:[%s1124] sm:$0xf]
        %v1126 = vld [vmem:[%s1124 + $0x4] sm:$0xf]
        %v1129 = vunpack.c.l.b16 %v1125
        %v1130 = vunpack.c.l.b16 %v1126
        %v1131 = vpack.c.b16 %v1130, %v1129
        %1132 = vrot.lane.b32.xlu0 %v199, 90
        %v1133 = vpop.permute.xlu0 %1132
        %1134 = vrot.lane.b32.xlu0 %v200, 90
        %v1135 = vpop.permute.xlu0 %1134
        %1136 = vrot.lane.b32.xlu0 %v201, 90
        %v1137 = vpop.permute.xlu0 %1136
        %vm1138 = vcmask 736256
        %v1139 = vsel %vm1138, %v1133, %v1135
        %v1140 = vsel %vm1138, %v1135, %v1137
        %v1142 = vsel %vm211, %v1131, 0
        %v1145 = vsel %vm215, %v1139, 0
        %v1148 = vsel %vm215, %v1140, 0
        %v1151 = vsel %vm215, %v1137, 0
        %1153 = vmatprep.subr.bf16.mxu0 0
        %1154 = vmatpush1.bf16.msra.mxu0 0
        %1155 = vmatprep.subr.bf16.mxu0 0
        %1156 = vmatpush1.bf16.msra.mxu0 0
        %1157 = vmatprep.subr.bf16.mxu0 0
        %1158 = vmatpush1.bf16.msra.mxu0 0
        %1159 = vmatprep.subr.bf16.mxu0 0
        %1160 = vmatpush1.bf16.msra.mxu0 0
        %1161 = vmatprep.subr.bf16.mxu0 0
        %1162 = vmatpush1.bf16.msra.mxu0 0
        %1163 = vmatprep.subr.bf16.mxu0 0
        %1164 = vmatpush1.bf16.msra.mxu0 0
        %1165 = vmatprep.subr.bf16.mxu0 0
        %1166 = vmatpush1.bf16.msra.mxu0 0
        %1167 = vmatprep.subr.bf16.mxu0 %v1148
        %1168 = vmatpush1.bf16.msra.mxu0 %v1145
        %1169 = vmatprep.subr.bf16.mxu0 0
        %1170 = vmatpush2.bf16.msra.mxu0 0
        %1171 = vmatprep.subr.bf16.mxu0 0
        %1172 = vmatpush2.bf16.msra.mxu0 0
        %1173 = vmatprep.subr.bf16.mxu0 0
        %1174 = vmatpush2.bf16.msra.mxu0 0
        %1175 = vmatprep.subr.bf16.mxu0 0
        %1176 = vmatpush2.bf16.msra.mxu0 0
        %1177 = vmatprep.subr.bf16.mxu0 0
        %1178 = vmatpush2.bf16.msra.mxu0 0
        %1179 = vmatprep.subr.bf16.mxu0 0
        %1180 = vmatpush2.bf16.msra.mxu0 0
        %1181 = vmatprep.subr.bf16.mxu0 0
        %1182 = vmatpush2.bf16.msra.mxu0 0
        %1183 = vmatprep.subr.bf16.mxu0 0
        %1184 = vmatpush2.bf16.msra.mxu0 0
        %1185 = vmatprep.mubr.bf16.mxu0 0
        %1186 = vmatmul.mubr.bf16.gmra.mxu0 %v1142
        %v1187 = vpop.f32.mrf.mxu0
        %v1188 = vadd.f32 0.0, %v1187
        %v1189 = vpop.f32.mrf.mxu0
        %v1190 = vadd.f32 0.0, %v1189
        %v1191 = vpop.f32.mrf.mxu0
        %v1192 = vadd.f32 0.0, %v1191
        %v1193 = vpop.f32.mrf.mxu0
        %v1194 = vadd.f32 0.0, %v1193
        %1195 = vdwg.mxu0
        %1196 = vmatprep.subr.bf16.mxu0 0
        %1197 = vmatpush1.bf16.msra.mxu0 0
        %1198 = vmatprep.subr.bf16.mxu0 0
        %1199 = vmatpush1.bf16.msra.mxu0 0
        %1200 = vmatprep.subr.bf16.mxu0 0
        %1201 = vmatpush1.bf16.msra.mxu0 0
        %1202 = vmatprep.subr.bf16.mxu0 0
        %1203 = vmatpush1.bf16.msra.mxu0 0
        %1204 = vmatprep.subr.bf16.mxu0 0
        %1205 = vmatpush1.bf16.msra.mxu0 0
        %1206 = vmatprep.subr.bf16.mxu0 0
        %1207 = vmatpush1.bf16.msra.mxu0 0
        %1208 = vmatprep.subr.bf16.mxu0 0
        %1209 = vmatpush1.bf16.msra.mxu0 0
        %1210 = vmatprep.subr.bf16.mxu0 0
        %1211 = vmatpush1.bf16.msra.mxu0 %v1151
        %1212 = vmatprep.subr.bf16.mxu0 0
        %1213 = vmatpush2.bf16.msra.mxu0 0
        %1214 = vmatprep.subr.bf16.mxu0 0
        %1215 = vmatpush2.bf16.msra.mxu0 0
        %1216 = vmatprep.subr.bf16.mxu0 0
        %1217 = vmatpush2.bf16.msra.mxu0 0
        %1218 = vmatprep.subr.bf16.mxu0 0
        %1219 = vmatpush2.bf16.msra.mxu0 0
        %1220 = vmatprep.subr.bf16.mxu0 0
        %1221 = vmatpush2.bf16.msra.mxu0 0
        %1222 = vmatprep.subr.bf16.mxu0 0
        %1223 = vmatpush2.bf16.msra.mxu0 0
        %1224 = vmatprep.subr.bf16.mxu0 0
        %1225 = vmatpush2.bf16.msra.mxu0 0
        %1226 = vmatprep.subr.bf16.mxu0 0
        %1227 = vmatpush2.bf16.msra.mxu0 0
        %1228 = vmatprep.mubr.bf16.mxu0 0
        %1229 = vmatmul.mubr.bf16.gmra.mxu0 %v1142
        %v1230 = vpop.f32.mrf.mxu0
        %v1231 = vadd.f32 0.0, %v1230
        %v1232 = vpop.f32.mrf.mxu0
        %v1233 = vpop.f32.mrf.mxu0
        %v1234 = vadd.f32 0.0, %v1233
        %v1235 = vpop.f32.mrf.mxu0
        %1236 = vdwg.mxu0
        %v1237 = vadd.f32 %v1118, %v1188
        %v1238 = vadd.f32 %v1119, %v1190
        %v1239 = vadd.f32 %v1120, %v1231
        %v1240 = vadd.f32 %v1121, %v1192
        %v1241 = vadd.f32 %v1122, %v1194
        %v1242 = vadd.f32 %v1123, %v1234
        %v1243 = vld [vmem:[%s2] sm:$0xff]
        %v1244 = vld [vmem:[%s2 + $0x8] sm:$0xff]
        %1246 = vset.pattern.permute.xlu0 0
        %1247 = vperm.xlu0 %1246, %v1243
        %v1248 = vpop.permute.xlu0 %1247
        %1251 = vset.pattern.permute.xlu0 0
        %1252 = vperm.xlu0 %1251, %v1244
        %v1253 = vpop.permute.xlu0 %1252
        %v1255 = vadd.f32 %v1237, %v1248
        %v1256 = vadd.f32 %v1238, %v1248
        %v1257 = vadd.f32 %v1239, %v1248
        %v1258 = vadd.f32 %v1240, %v1253
        %v1259 = vadd.f32 %v1241, %v1253
        %v1260 = vadd.f32 %v1242, %v1253
        %vm1261 = vcmp.ge.f32.partialorder %v1255, 0.0
        %vm1262 = vcmp.ge.f32.partialorder %v1256, 0.0
        %vm1263 = vcmp.ge.f32.partialorder %v1257, 0.0
        %vm1264 = vcmp.ge.f32.partialorder %v1258, 0.0
        %vm1265 = vcmp.ge.f32.partialorder %v1259, 0.0
        %vm1266 = vcmp.ge.f32.partialorder %v1260, 0.0
        %v1267 = vmul.f32 %v1255, 0.01
        %v1268 = vmul.f32 %v1256, 0.01
        %v1269 = vmul.f32 %v1257, 0.01
        %v1270 = vmul.f32 %v1258, 0.01
        %v1271 = vmul.f32 %v1259, 0.01
        %v1272 = vmul.f32 %v1260, 0.01
        %v1273 = vsel %vm1261, %v1255, %v1267
        %v1274 = vsel %vm1262, %v1256, %v1268
        %v1275 = vsel %vm1263, %v1257, %v1269
        %v1276 = vsel %vm1264, %v1258, %v1270
        %v1277 = vsel %vm1265, %v1259, %v1271
        %v1278 = vsel %vm1266, %v1260, %v1272
        %1279 = vst [vmem:[%s175] sm:$0xff] %v1273
        %1280 = vst [vmem:[%s175 + $0x8] sm:$0xff] %v1274
        %vm1281 = vcmask 261120
        %1282 = vst.msk [vmem:[%s175 + $0x10] sm:$0xff] %vm1281, %v1275
        %1283 = vst [vmem:[%s175 + $0x18] sm:$0xff] %v1276
        %1284 = vst [vmem:[%s175 + $0x20] sm:$0xff] %v1277
        %1285 = vst.msk [vmem:[%s175 + $0x28] sm:$0xff] %vm1281, %v1278
        %s1286 = sand.u32 %s105, 1
        %s1287 = scalar_lea.sflag [#allocation3], %s1286
        %s1288 = sand.u32 %s105, 1
        %s1289 = smul.addr %s1288, 48
        %s1290 = scalar_lea.vmem [#allocation2], %s1289
        // Predicated region
        $region33: #{tpu_custom_call.1} parent=31 // pred_check
          %p1291 = pneg %p115
        $region34: #{tpu_custom_call.1} parent=31 // pred_check_branch
          %1293 = sbr.rel (%p1291) target = $region36
        $region35: #{tpu_custom_call.1} parent=31 // pred_region
          %s1295 = ssub.s32 768, 768
          %1296 = vsyncadd %s1287, %s1295
          %s1297 = smul.addr %s21, 6
          %s1298 = smul.addr %s1297, 128
          %s1299 = scalar_lea.hbm %s3, %s1298
          %s1300 = sshll.u32 %s1290, 4
          %s1301 = int_to_ptr.vmem [resolvable:$true] %s1300
          %1306 = dma.vmem_to_hbm [thread:$0]  %s1301, 768, %s1299, %s1287, 384, 384, 24
        $region36: #{tpu_custom_call.1} parent=31 // pred_fallthru
          _
      $region32: #{tpu_custom_call.1} parent=5 // pred_fallthru
        _
      %p1307 = scmp.le.s32.totalorder 2, %s12
      // Predicated region
      $region37: #{tpu_custom_call.1} parent=5 // pred_check
        %p1308 = pneg %p1307
      $region38: #{tpu_custom_call.1} parent=5 // pred_check_branch
        %1310 = sbr.rel (%p1308) target = $region40
      $region39: #{tpu_custom_call.1} parent=5 // pred_region
        %s1311 = ssub.s32 %s12, 2
        // Predicated region
        $region41: #{tpu_custom_call.1} parent=39 // pred_check
          %p1312 = pneg %p121
        $region42: #{tpu_custom_call.1} parent=39 // pred_check_branch
          %1314 = sbr.rel (%p1312) target = $region44
        $region43: #{tpu_custom_call.1} parent=39 // pred_region
          %s1315 = sand.u32 %s106, 1
          %s1316 = scalar_lea.sflag [#allocation3], %s1315
          %s1317 = sand.u32 %s106, 1
          %s1318 = smul.addr %s1317, 48
          %s1319 = scalar_lea.vmem [#allocation2], %s1318
          %1320 = dma.done %s1316, 768
        $region44: #{tpu_custom_call.1} parent=39 // pred_fallthru
          _
      $region40: #{tpu_custom_call.1} parent=5 // pred_fallthru
        _
    $region6: #{tpu_custom_call.1} parent=1 // loop_footer
      %s16 = sadd.s32 1, %s12
    $region7: #{tpu_custom_call.1} parent=1 // loop_footer_branch
      %11 = sbr.rel target = $region3
    $region8: #{tpu_custom_call.1} parent=1 // loop_exit
      _
    %1321 = vsyncpa [#allocation3], 1
    %s1322 = scalar_lea.sflag [#allocation3], 1
    %1323 = vsyncpa %s1322, 1

</llo_original>
